<compile_context>
chip_gen: v5e
topology: v5e:2x2
jax: 0.10.0
libtpu: 0.0.40
codegen_flags: <defaults>
</compile_context>

<pallas_src>
import math
import numpy as np
import jax
import jax.numpy as jnp
from jax.experimental import pallas as pl
from jax.experimental.pallas import tpu as pltpu

_NEG_LARGE = -1e30      # finite stand-in for -inf (exp underflows to 0 in f32)


def _vmem_capacity_bytes():
    """Generation-dependent VMEM capacity (128 MiB on v5e/v6e, 64 MiB on v7x)."""
    try:
        return int(pltpu.get_tpu_info().vmem_capacity_bytes)
    except Exception:
        return 128 * 1024 * 1024


_VMEM_CAP = _vmem_capacity_bytes()
_BIG_VMEM = _VMEM_CAP >= 96 * 1024 * 1024
# Scoped-VMEM budget and row targets sized per generation instead of one
# hard-coded 40 MiB / 512-row cap for every chip.
_VMEM_LIMIT = (64 if _BIG_VMEM else 40) * 1024 * 1024
_EMB_ROW_TARGET = 1024 if _BIG_VMEM else 512
_ATTN_ROW_TARGET = 256


def _batch_tile(bs, seq, row_target):
    """Batch tile: divisor of bs with tile*seq <= row_target (>=1), preferring
    >= 2 grid steps (v7x has 2 TensorCores) and an even number of steps."""
    cap = max(1, row_target // max(seq, 1))
    divisors = [d for d in range(1, bs + 1) if bs % d == 0]
    cands = [d for d in divisors if d <= cap] or [1]
    if bs >= 2:
        two_plus = [d for d in cands if bs // d >= 2]
        if two_plus:
            cands = two_plus
    even = [d for d in cands if (bs // d) % 2 == 0]
    return max(even or cands)


def _layernorm(x, g, b, eps=1e-5):
    mu = jnp.mean(x, axis=-1, keepdims=True)
    var = jnp.mean((x - mu) ** 2, axis=-1, keepdims=True)
    return (x - mu) * jax.lax.rsqrt(var + eps) * g + b


# ---------------------------------------------------------------------------
# Kernel 1: embedding MLP + time feature + positional add + QKV  (batch tiled)
# ---------------------------------------------------------------------------
def embed_qkv_kernel(seq_ref, st_ref, len_ref, pos_ref,
                     w1_ref, b1_ref, g1_ref, be1_ref,
                     w2_ref, b2_ref, g2_ref, be2_ref,
                     wsel_ref, bsel_ref, wtime_ref, btime_ref,
                     wq_ref, wk_ref, wv_ref,
                     x_out, q_out, k_out, v_out):
    tb, seq, vocab = seq_ref.shape
    d_model = wq_ref.shape[0]
    rows = tb * seq

    # 2-layer embedding MLP (bf16 matmul operands, f32 accumulation / LayerNorm)
    xin = seq_ref[...].reshape(rows, vocab)
    h = jnp.dot(xin, w1_ref[...], preferred_element_type=jnp.float32) + b1_ref[...]
    h = jnp.maximum(_layernorm(h, g1_ref[...], be1_ref[...]), 0.0)
    h = jnp.dot(h.astype(jnp.bfloat16), w2_ref[...],
                preferred_element_type=jnp.float32) + b2_ref[...]
    h = jnp.maximum(_layernorm(h, g2_ref[...], be2_ref[...]), 0.0)

    # time feature: 1 - tanh((Linear(1,64)(t))^2) -> Linear(64, D)
    t = st_ref[...].reshape(rows, 1) * wsel_ref[...] + bsel_ref[...]   # Linear(1,64)
    t = 1.0 - jnp.tanh(t * t)
    t = jnp.dot(t.astype(jnp.bfloat16), wtime_ref[...],
                preferred_element_type=jnp.float32) + btime_ref[...]

    # positional encoding built in-kernel: row s of the (S, D) table for valid
    # positions (s < length), zeros (the table's pad row) otherwise.
    s_idx = jax.lax.broadcasted_iota(jnp.int32, (tb, seq), 1).astype(jnp.float32)
    valid = (s_idx < len_ref[...].reshape(tb, 1)).astype(jnp.float32)
    pos = pos_ref[...][None, :, :] * valid[:, :, None]                 # (tb, S, D)

    x = (h + t).reshape(tb, seq, d_model) + pos
    x_out[...] = x.astype(jnp.bfloat16)                                # bf16 residual stream

    xb = x.reshape(rows, d_model).astype(jnp.bfloat16)
    q_out[...] = jnp.dot(xb, wq_ref[...], preferred_element_type=jnp.float32
                         ).astype(jnp.bfloat16).reshape(tb, seq, d_model)
    k_out[...] = jnp.dot(xb, wk_ref[...], preferred_element_type=jnp.float32
                         ).astype(jnp.bfloat16).reshape(tb, seq, d_model)
    v_out[...] = jnp.dot(xb, wv_ref[...], preferred_element_type=jnp.float32
                         ).astype(jnp.bfloat16).reshape(tb, seq, d_model)


# ---------------------------------------------------------------------------
# Kernel 2: attention + fc + res/LN + FFN + res/LN + pooling head (batch tiled)
# ---------------------------------------------------------------------------
def attn_ffn_head_kernel(q_ref, k_ref, v_ref, m_ref, res_ref, st_ref, len_ref,
                         wfc_ref, g1_ref, be1_ref,
                         wf1_ref, bf1_ref, wf2_ref, bf2_ref, g2_ref, be2_ref,
                         wqry_ref, bqry_ref, wself_ref, bself_ref,
                         wstw_ref, bstw_ref, wqw_ref, bqw_ref,
                         out_ref):
    q = q_ref[...]                       # (TB*H, S, dh) bf16
    k = k_ref[...]
    v = v_ref[...]
    bh, seq, dh = q.shape
    tb = m_ref.shape[0]
    nh = bh // tb
    d_model = wfc_ref.shape[0]
    rows = tb * seq

    # ---- multi-head attention (the reference's non-standard head view is
    #      reproduced by the free HBM reshape in the wrapper) ----
    e = jnp.einsum("hqd,hkd->hqk", q, k,
                   preferred_element_type=jnp.float32) * (1.0 / math.sqrt(dh))
    e = e.reshape(tb, nh, seq, seq)
    # mask shared across heads: 1 = keep, 0 = mask (matches masked_fill(mask==0))
    e = jnp.where(m_ref[...][:, None, :, :] == 0.0, _NEG_LARGE, e)
    e = e - jnp.max(e, axis=-1, keepdims=True)
    p = jnp.exp(e)
    p = p * pl.reciprocal(jnp.sum(p, axis=-1, keepdims=True), approx=True)
    p = p.reshape(bh, seq, seq).astype(jnp.bfloat16)
    o = jnp.einsum("hqk,hkd->hqd", p, v,
                   preferred_element_type=jnp.float32)                 # (TB*H, S, dh)

    # ---- head merge (permute(0,2,1,3)+view) as a lane concat, then ONE K=D fc matmul ----
    o4 = o.reshape(tb, nh, seq, dh)
    merged = jnp.concatenate([o4[:, h] for h in range(nh)], axis=-1)   # (TB, S, D)
    merged = merged.reshape(rows, d_model).astype(jnp.bfloat16)
    y = jnp.dot(merged, wfc_ref[...], preferred_element_type=jnp.float32)

    # ---- residual + LN, FFN, residual + LN ----
    res = res_ref[...].reshape(rows, d_model).astype(jnp.float32)
    x1 = _layernorm(y + res, g1_ref[...], be1_ref[...])
    hdn = jnp.maximum(
        jnp.dot(x1.astype(jnp.bfloat16), wf1_ref[...],
                preferred_element_type=jnp.float32) + bf1_ref[...], 0.0)
    ffn = jnp.dot(hdn.astype(jnp.bfloat16), wf2_ref[...],
                  preferred_element_type=jnp.float32) + bf2_ref[...]
    out = _layernorm(ffn + x1, g2_ref[...], be2_ref[...])              # (rows, D) f32
    out3 = out.reshape(tb, seq, d_model)

    # ---- time / self-attention pooling head ----
    # padding masks and the final-state "gather" are built from lengths, so the
    # (bs,S,D) activation never round-trips HBM.
    lens = len_ref[...].reshape(tb, 1)                                 # float lengths
    s_idx = jax.lax.broadcasted_iota(jnp.int32, (tb, seq), 1).astype(jnp.float32)
    pad_add = jnp.where(s_idx >= lens, _NEG_LARGE, 0.0)                # (TB, S)
    fin_sel = (s_idx == lens - 1.0).astype(jnp.float32)                # one-hot at length-1
    fin = jnp.sum(out3 * fin_sel[:, :, None], axis=1)                  # (TB, D)

    # quiryes = relu(quiry_layer(final_statues))        (constant over seq)
    qry = jnp.maximum(
        jnp.dot(fin, wqry_ref[...], preferred_element_type=jnp.float32)
        + bqry_ref[...], 0.0)                                          # (TB, 64)

    # self weights: masked softmax over seq of self_layer(outputs[-1])
    sl = jnp.sum(out3 * wself_ref[...], axis=-1) + bself_ref[...] + pad_add
    sl = sl - jnp.max(sl, axis=1, keepdims=True)
    se = jnp.exp(sl)
    self_w = se * pl.reciprocal(jnp.sum(se, axis=1, keepdims=True), approx=True)

    # time weights: relu(weight_layer(selection_time_layer(t))) -- the two
    # stacked affine layers are collapsed into a single affine map (wstw/bstw)
    tf = jnp.maximum(st_ref[...] * wstw_ref[...] + bstw_ref[...], 0.0)  # (TB, S, 64)
    sel = jnp.sum(tf * qry[:, None, :], axis=-1) * 0.125 + pad_add      # (TB, S)
    sel = sel - jnp.max(sel, axis=1, keepdims=True)
    te = jnp.exp(sel)
    time_w = te * pl.reciprocal(jnp.sum(te, axis=1, keepdims=True), approx=True)

    # combination weights from the final state (constant over seq)
    aw = jnp.dot(fin, wqw_ref[...], preferred_element_type=jnp.float32) + bqw_ref[...]
    aw = aw - jnp.max(aw, axis=-1, keepdims=True)
    ae = jnp.exp(aw)
    aw = ae * pl.reciprocal(jnp.sum(ae, axis=-1, keepdims=True), approx=True)

    total = time_w * aw[:, 0:1] + self_w * aw[:, 1:2]                   # (TB, S)
    total = total / (jnp.sum(total, axis=1, keepdims=True) + 1e-5)
    out_ref[...] = jnp.sum(out3 * total[:, :, None], axis=1, keepdims=True)  # (TB,1,D)


# ---------------------------------------------------------------------------
# Parameters (deterministic, synthetic)
# ---------------------------------------------------------------------------
def init_params(key, V, D, S):
    assert D == 256, "reference time_layer is Linear(64, 256) => d_model must be 256"
    ks = iter(jax.random.split(key, 64))

    def w(shape, scale=0.05):
        return jax.random.normal(next(ks), shape, jnp.float32) * scale

    ones = lambda n: jnp.ones((1, n), jnp.float32)
    zeros = lambda n: jnp.zeros((1, n), jnp.float32)

    p = {}
    p["w_emb1"], p["b_emb1"] = w((V, D)), w((1, D))
    p["g_emb1"], p["be_emb1"] = ones(D), zeros(D)
    p["w_emb2"], p["b_emb2"] = w((D, D)), w((1, D))
    p["g_emb2"], p["be_emb2"] = ones(D), zeros(D)
    p["w_sel"], p["b_sel"] = w((1, 64)), w((1, 64))          # selection_layer
    p["w_time"], p["b_time"] = w((64, D)), w((1, D))         # time_layer
    p["w_q"], p["w_k"] = w((D, D)), w((D, D))
    p["w_v"], p["w_fc"] = w((D, D)), w((D, D))
    p["g_ln_attn"], p["be_ln_attn"] = ones(D), zeros(D)      # Attention.layer_norm
    p["w_ff1"], p["b_ff1"] = w((D, 4 * D)), w((1, 4 * D))
    p["w_ff2"], p["b_ff2"] = w((4 * D, D)), w((1, D))
    p["g_ln_out"], p["be_ln_out"] = ones(D), zeros(D)        # HitaNet.layer_norm
    p["w_qry"], p["b_qry"] = w((D, 64)), w((1, 64))
    p["w_self"], p["b_self"] = w((1, D)), w((1, 1))          # self_layer (stored transposed)
    p["w_st"], p["b_st"] = w((1, 64)), w((1, 64))            # selection_time_layer
    p["w_w"], p["b_w"] = w((64, 64)), w((1, 64))             # weight_layer
    p["w_qw"], p["b_qw"] = w((D, 2)), w((1, 2))              # quiry_weight_layer
    p["w_out"], p["b_out"] = w((D, 2)), w((1, 2))            # output_mlp

    # positional encoding table, exactly as in the reference PositionalEncoding
    # (rows for pos=0..S-1; the pad row is realized by the in-kernel length mask)
    pe = np.array([[pos / np.power(10000, 2.0 * (j // 2) / D) for j in range(D)]
                   for pos in range(S)])
    pe[:, 0::2] = np.sin(pe[:, 0::2])
    pe[:, 1::2] = np.cos(pe[:, 1::2])
    p["pos_table"] = jnp.asarray(pe.astype(np.float32))
    # NOTE: bias_embedding is declared in the reference __init__ but never used
    # in forward(), so it is intentionally omitted.
    return p


# ---------------------------------------------------------------------------
# Forward wrapper
# ---------------------------------------------------------------------------
def hitanet_forward(p, input_seqs, masks, lengths, seq_time_step, num_heads):
    bs, S, V = input_seqs.shape
    D = p["w_emb2"].shape[1]
    H = num_heads
    dh = D // H
    bf = jnp.bfloat16

    # ---- bf16 copies of the matmul weights (biases / LN params stay f32) ----
    w_emb1 = p["w_emb1"].astype(bf)
    w_emb2 = p["w_emb2"].astype(bf)
    w_time = p["w_time"].astype(bf)
    w_q, w_k, w_v = p["w_q"].astype(bf), p["w_k"].astype(bf), p["w_v"].astype(bf)
    w_fc = p["w_fc"].astype(bf)                          # single (D,D) block -> one K=D matmul
    w_ff1, w_ff2 = p["w_ff1"].astype(bf), p["w_ff2"].astype(bf)

    # selection_time_layer followed by weight_layer (no activation in between) is
    # affine(affine(x)): collapse into one affine map once in f32 (exact algebra).
    w_stw = (p["w_st"] @ p["w_w"]).reshape(1, 1, 64)
    b_stw = (p["b_st"] @ p["w_w"] + p["b_w"]).reshape(1, 1, 64)
    w_self3 = p["w_self"].reshape(1, 1, D)

    # ---- per-token / per-batch inputs ----
    st3 = (seq_time_step[..., None] / 180.0).astype(jnp.float32)       # (bs, S, 1)
    len3 = lengths.astype(jnp.float32).reshape(bs, 1, 1)               # lengths as f32
    seq_b = input_seqs.astype(bf)

    TB1 = _batch_tile(bs, S, _EMB_ROW_TARGET)
    TB2 = _batch_tile(bs, S, _ATTN_ROW_TARGET)

    blk = lambda shape: pl.BlockSpec(shape, lambda i: (i,) + (0,) * (len(shape) - 1))
    cst = lambda shape: pl.BlockSpec(shape, lambda i: (0,) * len(shape))

    # ---- stage 1: embedding MLP + time + positional add + QKV (batch tiled) ----
    x_res, q3, k3, v3 = pl.pallas_call(
        embed_qkv_kernel,
        grid=(bs // TB1,),
        in_specs=[blk((TB1, S, V)), blk((TB1, S, 1)), blk((TB1, 1, 1)),
                  cst((S, D)),
                  cst((V, D)), cst((1, D)), cst((1, D)), cst((1, D)),
                  cst((D, D)), cst((1, D)), cst((1, D)), cst((1, D)),
                  cst((1, 64)), cst((1, 64)), cst((64, D)), cst((1, D)),
                  cst((D, D)), cst((D, D)), cst((D, D))],
        out_specs=[blk((TB1, S, D)) for _ in range(4)],
        out_shape=tuple(jax.ShapeDtypeStruct((bs, S, D), bf) for _ in range(4)),
        compiler_params=pltpu.CompilerParams(
            dimension_semantics=("parallel",),
            vmem_limit_bytes=_VMEM_LIMIT),
    )(seq_b, st3, len3, p["pos_table"],
      w_emb1, p["b_emb1"], p["g_emb1"], p["be_emb1"],
      w_emb2, p["b_emb2"], p["g_emb2"], p["be_emb2"],
      p["w_sel"], p["b_sel"], w_time, p["b_time"],
      w_q, w_k, w_v)

    # reproduce the reference's non-standard view(bs, H, S, dh) exactly: a plain
    # row-major reshape of the (bs, S, D) projections (free in HBM).
    # TODO(synk): this non-standard head-split reshape is the only thing blocking a
    # full single-kernel fusion of stage 1 into stage 2.
    qh = q3.reshape(bs * H, S, dh)
    kh = k3.reshape(bs * H, S, dh)
    vh = v3.reshape(bs * H, S, dh)

    # ---- stage 2: attention + fc + res/LN + FFN + res/LN + pooling head ----
    # TODO(synk): `masks` is kept as a general (bs,S,S) input for fidelity with the
    # reference signature; when it is always the key-padding mask derived from
    # lengths it could be built in-kernel from len3 and dropped from HBM entirely.
    hblk = pl.BlockSpec((TB2 * H, S, dh), lambda b: (b, 0, 0))

    pooled = pl.pallas_call(
        attn_ffn_head_kernel,
        grid=(bs // TB2,),
        in_specs=[hblk, hblk, hblk,
                  blk((TB2, S, S)), blk((TB2, S, D)), blk((TB2, S, 1)), blk((TB2, 1, 1)),
                  cst((D, D)), cst((1, D)), cst((1, D)),
                  cst((D, 4 * D)), cst((1, 4 * D)), cst((4 * D, D)), cst((1, D)),
                  cst((1, D)), cst((1, D)),
                  cst((D, 64)), cst((1, 64)), cst((1, 1, D)), cst((1, 1)),
                  cst((1, 1, 64)), cst((1, 1, 64)), cst((D, 2)), cst((1, 2))],
        out_specs=blk((TB2, 1, D)),
        out_shape=jax.ShapeDtypeStruct((bs, 1, D), jnp.float32),
        compiler_params=pltpu.CompilerParams(
            dimension_semantics=("parallel",),
            vmem_limit_bytes=_VMEM_LIMIT),
    )(qh, kh, vh, masks.astype(jnp.float32), x_res, st3, len3,
      w_fc, p["g_ln_attn"], p["be_ln_attn"],
      w_ff1, p["b_ff1"], w_ff2, p["b_ff2"],
      p["g_ln_out"], p["be_ln_out"],
      p["w_qry"], p["b_qry"], w_self3, p["b_self"],
      w_stw, b_stw, p["w_qw"], p["b_qw"])

    # final Linear(d_model, 2) on the pooled features: tiny and lane-sparse (2
    # outputs), left to XLA so the kernel output stays lane-dense (D lanes).
    return pooled[:, 0, :] @ p["w_out"] + p["b_out"]                    # (bs, 2)


if __name__ == "__main__":
    bs, S, V, D, H = 2, 8, 32, 256, 4       # d_model fixed to 256 by the module

    params = init_params(jax.random.PRNGKey(0), V, D, S)

    k1, k2 = jax.random.split(jax.random.PRNGKey(0))
    input_seqs = jax.random.normal(k1, (bs, S, V), jnp.float32)
    seq_time_step = jax.random.uniform(k2, (bs, S), jnp.float32, 0.0, 100.0)
    lengths = jnp.array([S, 5], dtype=jnp.int32)
    masks = jnp.broadcast_to(
        (jnp.arange(S)[None, None, :] < lengths[:, None, None]).astype(jnp.float32),
        (bs, S, S))

    pred = hitanet_forward(params, input_seqs, masks, lengths, seq_time_step, H)
    pred = jax.block_until_ready(pred)
    assert pred.shape == (bs, 2)
    assert bool(jnp.all(jnp.isfinite(pred)))
    print("KERNEL_OK")
</pallas_src>

<mosaic_0001>
module attributes {stable_mosaic.version = 11 : i64} {
  func.func @embed_qkv_kernel(%arg0: i32, %arg1: memref<1x8x32xbf16, #tpu.memory_space<vmem>>, %arg2: memref<1x8x1xf32, #tpu.memory_space<vmem>>, %arg3: memref<1x1x1xf32, #tpu.memory_space<vmem>>, %arg4: memref<8x256xf32, #tpu.memory_space<vmem>>, %arg5: memref<32x256xbf16, #tpu.memory_space<vmem>>, %arg6: memref<1x256xf32, #tpu.memory_space<vmem>>, %arg7: memref<1x256xf32, #tpu.memory_space<vmem>>, %arg8: memref<1x256xf32, #tpu.memory_space<vmem>>, %arg9: memref<256x256xbf16, #tpu.memory_space<vmem>>, %arg10: memref<1x256xf32, #tpu.memory_space<vmem>>, %arg11: memref<1x256xf32, #tpu.memory_space<vmem>>, %arg12: memref<1x256xf32, #tpu.memory_space<vmem>>, %arg13: memref<1x64xf32, #tpu.memory_space<vmem>>, %arg14: memref<1x64xf32, #tpu.memory_space<vmem>>, %arg15: memref<64x256xbf16, #tpu.memory_space<vmem>>, %arg16: memref<1x256xf32, #tpu.memory_space<vmem>>, %arg17: memref<256x256xbf16, #tpu.memory_space<vmem>>, %arg18: memref<256x256xbf16, #tpu.memory_space<vmem>>, %arg19: memref<256x256xbf16, #tpu.memory_space<vmem>>, %arg20: memref<1x8x256xbf16, #tpu.memory_space<vmem>>, %arg21: memref<1x8x256xbf16, #tpu.memory_space<vmem>>, %arg22: memref<1x8x256xbf16, #tpu.memory_space<vmem>>, %arg23: memref<1x8x256xbf16, #tpu.memory_space<vmem>>) attributes {dimension_semantics = [#tpu.dimension_semantics<parallel>], iteration_bounds = array<i64: 2>, scalar_prefetch = 0 : i64, scratch_operands = 0 : i64, tpu.core_type = #tpu.core_type<tc>, window_params = [{transform_indices = @transform_0, window_bounds = array<i64: 1, 8, 32>}, {transform_indices = @transform_1, window_bounds = array<i64: 1, 8, 1>}, {transform_indices = @transform_2, window_bounds = array<i64: 1, 1, 1>}, {pipeline_mode = #tpu.pipeline_mode<synchronous>, transform_indices = @transform_3, window_bounds = array<i64: 8, 256>}, {pipeline_mode = #tpu.pipeline_mode<synchronous>, transform_indices = @transform_4, window_bounds = array<i64: 32, 256>}, {pipeline_mode = #tpu.pipeline_mode<synchronous>, transform_indices = @transform_5, window_bounds = array<i64: 1, 256>}, {pipeline_mode = #tpu.pipeline_mode<synchronous>, transform_indices = @transform_6, window_bounds = array<i64: 1, 256>}, {pipeline_mode = #tpu.pipeline_mode<synchronous>, transform_indices = @transform_7, window_bounds = array<i64: 1, 256>}, {pipeline_mode = #tpu.pipeline_mode<synchronous>, transform_indices = @transform_8, window_bounds = array<i64: 256, 256>}, {pipeline_mode = #tpu.pipeline_mode<synchronous>, transform_indices = @transform_9, window_bounds = array<i64: 1, 256>}, {pipeline_mode = #tpu.pipeline_mode<synchronous>, transform_indices = @transform_10, window_bounds = array<i64: 1, 256>}, {pipeline_mode = #tpu.pipeline_mode<synchronous>, transform_indices = @transform_11, window_bounds = array<i64: 1, 256>}, {pipeline_mode = #tpu.pipeline_mode<synchronous>, transform_indices = @transform_12, window_bounds = array<i64: 1, 64>}, {pipeline_mode = #tpu.pipeline_mode<synchronous>, transform_indices = @transform_13, window_bounds = array<i64: 1, 64>}, {pipeline_mode = #tpu.pipeline_mode<synchronous>, transform_indices = @transform_14, window_bounds = array<i64: 64, 256>}, {pipeline_mode = #tpu.pipeline_mode<synchronous>, transform_indices = @transform_15, window_bounds = array<i64: 1, 256>}, {pipeline_mode = #tpu.pipeline_mode<synchronous>, transform_indices = @transform_16, window_bounds = array<i64: 256, 256>}, {pipeline_mode = #tpu.pipeline_mode<synchronous>, transform_indices = @transform_17, window_bounds = array<i64: 256, 256>}, {pipeline_mode = #tpu.pipeline_mode<synchronous>, transform_indices = @transform_18, window_bounds = array<i64: 256, 256>}, {transform_indices = @transform_19, window_bounds = array<i64: 1, 8, 256>}, {transform_indices = @transform_20, window_bounds = array<i64: 1, 8, 256>}, {transform_indices = @transform_21, window_bounds = array<i64: 1, 8, 256>}, {transform_indices = @transform_22, window_bounds = array<i64: 1, 8, 256>}]} {
    %c0 = arith.constant 0 : index
    %c0_0 = arith.constant 0 : index
    %c0_1 = arith.constant 0 : index
    %0 = vector.load %arg1[%c0, %c0_0, %c0_1] : memref<1x8x32xbf16, #tpu.memory_space<vmem>>, vector<1x8x32xbf16>
    %1 = vector.shape_cast %0 : vector<1x8x32xbf16> to vector<8x32xbf16>
    %c0_2 = arith.constant 0 : index
    %c0_3 = arith.constant 0 : index
    %2 = vector.load %arg5[%c0_2, %c0_3] : memref<32x256xbf16, #tpu.memory_space<vmem>>, vector<32x256xbf16>
    %cst = arith.constant dense<0.000000e+00> : vector<8x256xf32>
    %3 = tpu.matmul %1, %2, %cst {dimension_numbers = #tpu.dot_dimension_numbers<[1], [0], [0], [1], [0, 0, 1, 1], [], []>} : vector<8x32xbf16>, vector<32x256xbf16>, vector<8x256xf32> -> vector<8x256xf32>
    %c0_4 = arith.constant 0 : index
    %c0_5 = arith.constant 0 : index
    %4 = vector.load %arg6[%c0_4, %c0_5] : memref<1x256xf32, #tpu.memory_space<vmem>>, vector<1x256xf32>
    %5 = vector.broadcast %4 : vector<1x256xf32> to vector<8x256xf32>
    %6 = arith.addf %3, %5 : vector<8x256xf32>
    %c0_6 = arith.constant 0 : index
    %c0_7 = arith.constant 0 : index
    %7 = vector.load %arg7[%c0_6, %c0_7] : memref<1x256xf32, #tpu.memory_space<vmem>>, vector<1x256xf32>
    %c0_8 = arith.constant 0 : index
    %c0_9 = arith.constant 0 : index
    %8 = vector.load %arg8[%c0_8, %c0_9] : memref<1x256xf32, #tpu.memory_space<vmem>>, vector<1x256xf32>
    %cst_10 = arith.constant dense<0.000000e+00> : vector<8xf32>
    %9 = vector.multi_reduction <add>, %6, %cst_10 [1] : vector<8x256xf32> to vector<8xf32>
    %10 = vector.shape_cast %9 : vector<8xf32> to vector<8x1xf32>
    %cst_11 = arith.constant 2.560000e+02 : f32
    %11 = vector.broadcast %cst_11 : f32 to vector<8x1xf32>
    %12 = arith.divf %10, %11 : vector<8x1xf32>
    %13 = vector.broadcast %12 : vector<8x1xf32> to vector<8x256xf32>
    %14 = arith.subf %6, %13 : vector<8x256xf32>
    %15 = arith.mulf %14, %14 : vector<8x256xf32>
    %cst_12 = arith.constant dense<0.000000e+00> : vector<8xf32>
    %16 = vector.multi_reduction <add>, %15, %cst_12 [1] : vector<8x256xf32> to vector<8xf32>
    %17 = vector.shape_cast %16 : vector<8xf32> to vector<8x1xf32>
    %cst_13 = arith.constant 2.560000e+02 : f32
    %18 = vector.broadcast %cst_13 : f32 to vector<8x1xf32>
    %19 = arith.divf %17, %18 : vector<8x1xf32>
    %20 = vector.broadcast %12 : vector<8x1xf32> to vector<8x256xf32>
    %21 = arith.subf %6, %20 : vector<8x256xf32>
    %cst_14 = arith.constant 9.99999974E-6 : f32
    %22 = vector.broadcast %cst_14 : f32 to vector<8x1xf32>
    %23 = arith.addf %19, %22 : vector<8x1xf32>
    %24 = math.rsqrt %23 : vector<8x1xf32>
    %25 = vector.broadcast %24 : vector<8x1xf32> to vector<8x256xf32>
    %26 = arith.mulf %21, %25 : vector<8x256xf32>
    %27 = vector.broadcast %7 : vector<1x256xf32> to vector<8x256xf32>
    %28 = arith.mulf %26, %27 : vector<8x256xf32>
    %29 = vector.broadcast %8 : vector<1x256xf32> to vector<8x256xf32>
    %30 = arith.addf %28, %29 : vector<8x256xf32>
    %cst_15 = arith.constant 0.000000e+00 : f32
    %31 = vector.broadcast %cst_15 : f32 to vector<8x256xf32>
    %32 = arith.maximumf %30, %31 : vector<8x256xf32>
    %33 = arith.truncf %32 : vector<8x256xf32> to vector<8x256xbf16>
    %c0_16 = arith.constant 0 : index
    %c0_17 = arith.constant 0 : index
    %34 = vector.load %arg9[%c0_16, %c0_17] : memref<256x256xbf16, #tpu.memory_space<vmem>>, vector<256x256xbf16>
    %cst_18 = arith.constant dense<0.000000e+00> : vector<8x256xf32>
    %35 = tpu.matmul %33, %34, %cst_18 {dimension_numbers = #tpu.dot_dimension_numbers<[1], [0], [0], [1], [0, 0, 1, 1], [], []>} : vector<8x256xbf16>, vector<256x256xbf16>, vector<8x256xf32> -> vector<8x256xf32>
    %c0_19 = arith.constant 0 : index
    %c0_20 = arith.constant 0 : index
    %36 = vector.load %arg10[%c0_19, %c0_20] : memref<1x256xf32, #tpu.memory_space<vmem>>, vector<1x256xf32>
    %37 = vector.broadcast %36 : vector<1x256xf32> to vector<8x256xf32>
    %38 = arith.addf %35, %37 : vector<8x256xf32>
    %c0_21 = arith.constant 0 : index
    %c0_22 = arith.constant 0 : index
    %39 = vector.load %arg11[%c0_21, %c0_22] : memref<1x256xf32, #tpu.memory_space<vmem>>, vector<1x256xf32>
    %c0_23 = arith.constant 0 : index
    %c0_24 = arith.constant 0 : index
    %40 = vector.load %arg12[%c0_23, %c0_24] : memref<1x256xf32, #tpu.memory_space<vmem>>, vector<1x256xf32>
    %cst_25 = arith.constant dense<0.000000e+00> : vector<8xf32>
    %41 = vector.multi_reduction <add>, %38, %cst_25 [1] : vector<8x256xf32> to vector<8xf32>
    %42 = vector.shape_cast %41 : vector<8xf32> to vector<8x1xf32>
    %cst_26 = arith.constant 2.560000e+02 : f32
    %43 = vector.broadcast %cst_26 : f32 to vector<8x1xf32>
    %44 = arith.divf %42, %43 : vector<8x1xf32>
    %45 = vector.broadcast %44 : vector<8x1xf32> to vector<8x256xf32>
    %46 = arith.subf %38, %45 : vector<8x256xf32>
    %47 = arith.mulf %46, %46 : vector<8x256xf32>
    %cst_27 = arith.constant dense<0.000000e+00> : vector<8xf32>
    %48 = vector.multi_reduction <add>, %47, %cst_27 [1] : vector<8x256xf32> to vector<8xf32>
    %49 = vector.shape_cast %48 : vector<8xf32> to vector<8x1xf32>
    %cst_28 = arith.constant 2.560000e+02 : f32
    %50 = vector.broadcast %cst_28 : f32 to vector<8x1xf32>
    %51 = arith.divf %49, %50 : vector<8x1xf32>
    %52 = vector.broadcast %44 : vector<8x1xf32> to vector<8x256xf32>
    %53 = arith.subf %38, %52 : vector<8x256xf32>
    %cst_29 = arith.constant 9.99999974E-6 : f32
    %54 = vector.broadcast %cst_29 : f32 to vector<8x1xf32>
    %55 = arith.addf %51, %54 : vector<8x1xf32>
    %56 = math.rsqrt %55 : vector<8x1xf32>
    %57 = vector.broadcast %56 : vector<8x1xf32> to vector<8x256xf32>
    %58 = arith.mulf %53, %57 : vector<8x256xf32>
    %59 = vector.broadcast %39 : vector<1x256xf32> to vector<8x256xf32>
    %60 = arith.mulf %58, %59 : vector<8x256xf32>
    %61 = vector.broadcast %40 : vector<1x256xf32> to vector<8x256xf32>
    %62 = arith.addf %60, %61 : vector<8x256xf32>
    %cst_30 = arith.constant 0.000000e+00 : f32
    %63 = vector.broadcast %cst_30 : f32 to vector<8x256xf32>
    %64 = arith.maximumf %62, %63 : vector<8x256xf32>
    %c0_31 = arith.constant 0 : index
    %c0_32 = arith.constant 0 : index
    %c0_33 = arith.constant 0 : index
    %65 = vector.load %arg2[%c0_31, %c0_32, %c0_33] : memref<1x8x1xf32, #tpu.memory_space<vmem>>, vector<1x8x1xf32>
    %66 = vector.shape_cast %65 : vector<1x8x1xf32> to vector<8x1xf32>
    %c0_34 = arith.constant 0 : index
    %c0_35 = arith.constant 0 : index
    %67 = vector.load %arg13[%c0_34, %c0_35] : memref<1x64xf32, #tpu.memory_space<vmem>>, vector<1x64xf32>
    %68 = vector.broadcast %66 : vector<8x1xf32> to vector<8x64xf32>
    %69 = vector.broadcast %67 : vector<1x64xf32> to vector<8x64xf32>
    %70 = arith.mulf %68, %69 : vector<8x64xf32>
    %c0_36 = arith.constant 0 : index
    %c0_37 = arith.constant 0 : index
    %71 = vector.load %arg14[%c0_36, %c0_37] : memref<1x64xf32, #tpu.memory_space<vmem>>, vector<1x64xf32>
    %72 = vector.broadcast %71 : vector<1x64xf32> to vector<8x64xf32>
    %73 = arith.addf %70, %72 : vector<8x64xf32>
    %74 = arith.mulf %73, %73 : vector<8x64xf32>
    %75 = math.tanh %74 : vector<8x64xf32>
    %cst_38 = arith.constant 1.000000e+00 : f32
    %76 = vector.broadcast %cst_38 : f32 to vector<8x64xf32>
    %77 = arith.subf %76, %75 : vector<8x64xf32>
    %78 = arith.truncf %77 : vector<8x64xf32> to vector<8x64xbf16>
    %c0_39 = arith.constant 0 : index
    %c0_40 = arith.constant 0 : index
    %79 = vector.load %arg15[%c0_39, %c0_40] : memref<64x256xbf16, #tpu.memory_space<vmem>>, vector<64x256xbf16>
    %cst_41 = arith.constant dense<0.000000e+00> : vector<8x256xf32>
    %80 = tpu.matmul %78, %79, %cst_41 {dimension_numbers = #tpu.dot_dimension_numbers<[1], [0], [0], [1], [0, 0, 1, 1], [], []>} : vector<8x64xbf16>, vector<64x256xbf16>, vector<8x256xf32> -> vector<8x256xf32>
    %c0_42 = arith.constant 0 : index
    %c0_43 = arith.constant 0 : index
    %81 = vector.load %arg16[%c0_42, %c0_43] : memref<1x256xf32, #tpu.memory_space<vmem>>, vector<1x256xf32>
    %82 = vector.broadcast %81 : vector<1x256xf32> to vector<8x256xf32>
    %83 = arith.addf %80, %82 : vector<8x256xf32>
    %84 = tpu.iota {dimensions = array<i32: 1>} : vector<1x8xi32>
    %85 = arith.sitofp %84 : vector<1x8xi32> to vector<1x8xf32>
    %c0_44 = arith.constant 0 : index
    %c0_45 = arith.constant 0 : index
    %c0_46 = arith.constant 0 : index
    %86 = vector.load %arg3[%c0_44, %c0_45, %c0_46] : memref<1x1x1xf32, #tpu.memory_space<vmem>>, vector<1x1x1xf32>
    %87 = vector.shape_cast %86 : vector<1x1x1xf32> to vector<1x1xf32>
    %88 = vector.broadcast %87 : vector<1x1xf32> to vector<1x8xf32>
    %89 = arith.cmpf olt, %85, %88 : vector<1x8xf32>
    %90 = arith.extui %89 : vector<1x8xi1> to vector<1x8xi32>
    %91 = arith.sitofp %90 : vector<1x8xi32> to vector<1x8xf32>
    %c0_47 = arith.constant 0 : index
    %c0_48 = arith.constant 0 : index
    %92 = vector.load %arg4[%c0_47, %c0_48] : memref<8x256xf32, #tpu.memory_space<vmem>>, vector<8x256xf32>
    %93 = vector.shape_cast %92 : vector<8x256xf32> to vector<1x8x256xf32>
    %94 = vector.shape_cast %91 : vector<1x8xf32> to vector<1x8x1xf32>
    %95 = vector.broadcast %94 : vector<1x8x1xf32> to vector<1x8x256xf32>
    %96 = arith.mulf %93, %95 : vector<1x8x256xf32>
    %97 = arith.addf %64, %83 : vector<8x256xf32>
    %98 = vector.shape_cast %97 : vector<8x256xf32> to vector<1x8x256xf32>
    %99 = arith.addf %98, %96 : vector<1x8x256xf32>
    %100 = arith.truncf %99 : vector<1x8x256xf32> to vector<1x8x256xbf16>
    %c0_49 = arith.constant 0 : index
    %c0_50 = arith.constant 0 : index
    %c0_51 = arith.constant 0 : index
    %101 = vector.load %arg20[%c0_49, %c0_50, %c0_51] : memref<1x8x256xbf16, #tpu.memory_space<vmem>>, vector<1x8x256xbf16>
    tpu.vector_store %arg20[%c0_49, %c0_50, %c0_51], %100 {strides = array<i32>} : memref<1x8x256xbf16, #tpu.memory_space<vmem>>, vector<1x8x256xbf16>,
    %102 = vector.shape_cast %99 : vector<1x8x256xf32> to vector<8x256xf32>
    %103 = arith.truncf %102 : vector<8x256xf32> to vector<8x256xbf16>
    %c0_52 = arith.constant 0 : index
    %c0_53 = arith.constant 0 : index
    %104 = vector.load %arg17[%c0_52, %c0_53] : memref<256x256xbf16, #tpu.memory_space<vmem>>, vector<256x256xbf16>
    %cst_54 = arith.constant dense<0.000000e+00> : vector<8x256xf32>
    %105 = tpu.matmul %103, %104, %cst_54 {dimension_numbers = #tpu.dot_dimension_numbers<[1], [0], [0], [1], [0, 0, 1, 1], [], []>} : vector<8x256xbf16>, vector<256x256xbf16>, vector<8x256xf32> -> vector<8x256xf32>
    %106 = arith.truncf %105 : vector<8x256xf32> to vector<8x256xbf16>
    %107 = vector.shape_cast %106 : vector<8x256xbf16> to vector<1x8x256xbf16>
    %c0_55 = arith.constant 0 : index
    %c0_56 = arith.constant 0 : index
    %c0_57 = arith.constant 0 : index
    %108 = vector.load %arg21[%c0_55, %c0_56, %c0_57] : memref<1x8x256xbf16, #tpu.memory_space<vmem>>, vector<1x8x256xbf16>
    tpu.vector_store %arg21[%c0_55, %c0_56, %c0_57], %107 {strides = array<i32>} : memref<1x8x256xbf16, #tpu.memory_space<vmem>>, vector<1x8x256xbf16>,
    %c0_58 = arith.constant 0 : index
    %c0_59 = arith.constant 0 : index
    %109 = vector.load %arg18[%c0_58, %c0_59] : memref<256x256xbf16, #tpu.memory_space<vmem>>, vector<256x256xbf16>
    %cst_60 = arith.constant dense<0.000000e+00> : vector<8x256xf32>
    %110 = tpu.matmul %103, %109, %cst_60 {dimension_numbers = #tpu.dot_dimension_numbers<[1], [0], [0], [1], [0, 0, 1, 1], [], []>} : vector<8x256xbf16>, vector<256x256xbf16>, vector<8x256xf32> -> vector<8x256xf32>
    %111 = arith.truncf %110 : vector<8x256xf32> to vector<8x256xbf16>
    %112 = vector.shape_cast %111 : vector<8x256xbf16> to vector<1x8x256xbf16>
    %c0_61 = arith.constant 0 : index
    %c0_62 = arith.constant 0 : index
    %c0_63 = arith.constant 0 : index
    %113 = vector.load %arg22[%c0_61, %c0_62, %c0_63] : memref<1x8x256xbf16, #tpu.memory_space<vmem>>, vector<1x8x256xbf16>
    tpu.vector_store %arg22[%c0_61, %c0_62, %c0_63], %112 {strides = array<i32>} : memref<1x8x256xbf16, #tpu.memory_space<vmem>>, vector<1x8x256xbf16>,
    %c0_64 = arith.constant 0 : index
    %c0_65 = arith.constant 0 : index
    %114 = vector.load %arg19[%c0_64, %c0_65] : memref<256x256xbf16, #tpu.memory_space<vmem>>, vector<256x256xbf16>
    %cst_66 = arith.constant dense<0.000000e+00> : vector<8x256xf32>
    %115 = tpu.matmul %103, %114, %cst_66 {dimension_numbers = #tpu.dot_dimension_numbers<[1], [0], [0], [1], [0, 0, 1, 1], [], []>} : vector<8x256xbf16>, vector<256x256xbf16>, vector<8x256xf32> -> vector<8x256xf32>
    %116 = arith.truncf %115 : vector<8x256xf32> to vector<8x256xbf16>
    %117 = vector.shape_cast %116 : vector<8x256xbf16> to vector<1x8x256xbf16>
    %c0_67 = arith.constant 0 : index
    %c0_68 = arith.constant 0 : index
    %c0_69 = arith.constant 0 : index
    %118 = vector.load %arg23[%c0_67, %c0_68, %c0_69] : memref<1x8x256xbf16, #tpu.memory_space<vmem>>, vector<1x8x256xbf16>
    tpu.vector_store %arg23[%c0_67, %c0_68, %c0_69], %117 {strides = array<i32>} : memref<1x8x256xbf16, #tpu.memory_space<vmem>>, vector<1x8x256xbf16>,
    return
  }
  func.func @transform_0(%arg0: i32) -> (i32, i32, i32) {
    %c0_i32 = arith.constant 0 : i32
    %c0_i32_0 = arith.constant 0 : i32
    %c0_i32_1 = arith.constant 0 : i32
    return %arg0, %c0_i32, %c0_i32_0 : i32, i32, i32
  }
  func.func @transform_1(%arg0: i32) -> (i32, i32, i32) {
    %c0_i32 = arith.constant 0 : i32
    %c0_i32_0 = arith.constant 0 : i32
    %c0_i32_1 = arith.constant 0 : i32
    return %arg0, %c0_i32, %c0_i32_0 : i32, i32, i32
  }
  func.func @transform_2(%arg0: i32) -> (i32, i32, i32) {
    %c0_i32 = arith.constant 0 : i32
    %c0_i32_0 = arith.constant 0 : i32
    %c0_i32_1 = arith.constant 0 : i32
    return %arg0, %c0_i32, %c0_i32_0 : i32, i32, i32
  }
  func.func @transform_3(%arg0: i32) -> (i32, i32) {
    %c0_i32 = arith.constant 0 : i32
    %c0_i32_0 = arith.constant 0 : i32
    %c0_i32_1 = arith.constant 0 : i32
    return %c0_i32, %c0_i32_0 : i32, i32
  }
  func.func @transform_4(%arg0: i32) -> (i32, i32) {
    %c0_i32 = arith.constant 0 : i32
    %c0_i32_0 = arith.constant 0 : i32
    %c0_i32_1 = arith.constant 0 : i32
    return %c0_i32, %c0_i32_0 : i32, i32
  }
  func.func @transform_5(%arg0: i32) -> (i32, i32) {
    %c0_i32 = arith.constant 0 : i32
    %c0_i32_0 = arith.constant 0 : i32
    %c0_i32_1 = arith.constant 0 : i32
    return %c0_i32, %c0_i32_0 : i32, i32
  }
  func.func @transform_6(%arg0: i32) -> (i32, i32) {
    %c0_i32 = arith.constant 0 : i32
    %c0_i32_0 = arith.constant 0 : i32
    %c0_i32_1 = arith.constant 0 : i32
    return %c0_i32, %c0_i32_0 : i32, i32
  }
  func.func @transform_7(%arg0: i32) -> (i32, i32) {
    %c0_i32 = arith.constant 0 : i32
    %c0_i32_0 = arith.constant 0 : i32
    %c0_i32_1 = arith.constant 0 : i32
    return %c0_i32, %c0_i32_0 : i32, i32
  }
  func.func @transform_8(%arg0: i32) -> (i32, i32) {
    %c0_i32 = arith.constant 0 : i32
    %c0_i32_0 = arith.constant 0 : i32
    %c0_i32_1 = arith.constant 0 : i32
    return %c0_i32, %c0_i32_0 : i32, i32
  }
  func.func @transform_9(%arg0: i32) -> (i32, i32) {
    %c0_i32 = arith.constant 0 : i32
    %c0_i32_0 = arith.constant 0 : i32
    %c0_i32_1 = arith.constant 0 : i32
    return %c0_i32, %c0_i32_0 : i32, i32
  }
  func.func @transform_10(%arg0: i32) -> (i32, i32) {
    %c0_i32 = arith.constant 0 : i32
    %c0_i32_0 = arith.constant 0 : i32
    %c0_i32_1 = arith.constant 0 : i32
    return %c0_i32, %c0_i32_0 : i32, i32
  }
  func.func @transform_11(%arg0: i32) -> (i32, i32) {
    %c0_i32 = arith.constant 0 : i32
    %c0_i32_0 = arith.constant 0 : i32
    %c0_i32_1 = arith.constant 0 : i32
    return %c0_i32, %c0_i32_0 : i32, i32
  }
  func.func @transform_12(%arg0: i32) -> (i32, i32) {
    %c0_i32 = arith.constant 0 : i32
    %c0_i32_0 = arith.constant 0 : i32
    %c0_i32_1 = arith.constant 0 : i32
    return %c0_i32, %c0_i32_0 : i32, i32
  }
  func.func @transform_13(%arg0: i32) -> (i32, i32) {
    %c0_i32 = arith.constant 0 : i32
    %c0_i32_0 = arith.constant 0 : i32
    %c0_i32_1 = arith.constant 0 : i32
    return %c0_i32, %c0_i32_0 : i32, i32
  }
  func.func @transform_14(%arg0: i32) -> (i32, i32) {
    %c0_i32 = arith.constant 0 : i32
    %c0_i32_0 = arith.constant 0 : i32
    %c0_i32_1 = arith.constant 0 : i32
    return %c0_i32, %c0_i32_0 : i32, i32
  }
  func.func @transform_15(%arg0: i32) -> (i32, i32) {
    %c0_i32 = arith.constant 0 : i32
    %c0_i32_0 = arith.constant 0 : i32
    %c0_i32_1 = arith.constant 0 : i32
    return %c0_i32, %c0_i32_0 : i32, i32
  }
  func.func @transform_16(%arg0: i32) -> (i32, i32) {
    %c0_i32 = arith.constant 0 : i32
    %c0_i32_0 = arith.constant 0 : i32
    %c0_i32_1 = arith.constant 0 : i32
    return %c0_i32, %c0_i32_0 : i32, i32
  }
  func.func @transform_17(%arg0: i32) -> (i32, i32) {
    %c0_i32 = arith.constant 0 : i32
    %c0_i32_0 = arith.constant 0 : i32
    %c0_i32_1 = arith.constant 0 : i32
    return %c0_i32, %c0_i32_0 : i32, i32
  }
  func.func @transform_18(%arg0: i32) -> (i32, i32) {
    %c0_i32 = arith.constant 0 : i32
    %c0_i32_0 = arith.constant 0 : i32
    %c0_i32_1 = arith.constant 0 : i32
    return %c0_i32, %c0_i32_0 : i32, i32
  }
  func.func @transform_19(%arg0: i32) -> (i32, i32, i32) {
    %c0_i32 = arith.constant 0 : i32
    %c0_i32_0 = arith.constant 0 : i32
    %c0_i32_1 = arith.constant 0 : i32
    return %arg0, %c0_i32, %c0_i32_0 : i32, i32, i32
  }
  func.func @transform_20(%arg0: i32) -> (i32, i32, i32) {
    %c0_i32 = arith.constant 0 : i32
    %c0_i32_0 = arith.constant 0 : i32
    %c0_i32_1 = arith.constant 0 : i32
    return %arg0, %c0_i32, %c0_i32_0 : i32, i32, i32
  }
  func.func @transform_21(%arg0: i32) -> (i32, i32, i32) {
    %c0_i32 = arith.constant 0 : i32
    %c0_i32_0 = arith.constant 0 : i32
    %c0_i32_1 = arith.constant 0 : i32
    return %arg0, %c0_i32, %c0_i32_0 : i32, i32, i32
  }
  func.func @transform_22(%arg0: i32) -> (i32, i32, i32) {
    %c0_i32 = arith.constant 0 : i32
    %c0_i32_0 = arith.constant 0 : i32
    %c0_i32_1 = arith.constant 0 : i32
    return %arg0, %c0_i32, %c0_i32_0 : i32, i32, i32
  }
}

</mosaic_0001>

<llo_original>
// kernel: tpu_custom_call.1
$region0: #{tpu_custom_call.1}
  #allocation0 [shape = 'u32[]', space=smem, size = 0x4, offset = 0x4, fixed_abs, tag = 'smem constant byte address 0x4 - core index']
  #allocation1 [shape = 'u32[72,128]{1,0:T(1,128)}', space=vmem, size = 0x9000, scoped, tag = 'internal scratch']
  %s0 = inlined_call_operand.hbm [shape: bf16[2,8,32], index: 0, kind: input, shape index: {}]
  %s1 = inlined_call_operand.vmem [shape: f32[2,8,1], index: 1, kind: input, shape index: {}]
  %s2 = inlined_call_operand.vmem [shape: f32[2,1,1], index: 2, kind: input, shape index: {}]
  %s3 = inlined_call_operand.vmem [shape: f32[8,256], index: 3, kind: input, shape index: {}]
  %s4 = inlined_call_operand.hbm [shape: bf16[32,256], index: 4, kind: input, shape index: {}]
  %s5 = inlined_call_operand.vmem [shape: f32[1,256], index: 5, kind: input, shape index: {}]
  %s6 = inlined_call_operand.vmem [shape: f32[1,256], index: 6, kind: input, shape index: {}]
  %s7 = inlined_call_operand.vmem [shape: f32[1,256], index: 7, kind: input, shape index: {}]
  %s8 = inlined_call_operand.hbm [shape: bf16[256,256], index: 8, kind: input, shape index: {}]
  %s9 = inlined_call_operand.vmem [shape: f32[1,256], index: 9, kind: input, shape index: {}]
  %s10 = inlined_call_operand.vmem [shape: f32[1,256], index: 10, kind: input, shape index: {}]
  %s11 = inlined_call_operand.hbm [shape: f32[1,256], index: 11, kind: input, shape index: {}]
  %s12 = inlined_call_operand.vmem [shape: f32[1,64], index: 12, kind: input, shape index: {}]
  %s13 = inlined_call_operand.vmem [shape: f32[1,64], index: 13, kind: input, shape index: {}]
  %s14 = inlined_call_operand.hbm [shape: bf16[64,256], index: 14, kind: input, shape index: {}]
  %s15 = inlined_call_operand.vmem [shape: f32[1,256], index: 15, kind: input, shape index: {}]
  %s16 = inlined_call_operand.hbm [shape: bf16[256,256], index: 16, kind: input, shape index: {}]
  %s17 = inlined_call_operand.hbm [shape: bf16[256,256], index: 17, kind: input, shape index: {}]
  %s18 = inlined_call_operand.hbm [shape: bf16[256,256], index: 18, kind: input, shape index: {}]
  %s19 = inlined_call_operand.hbm [shape: bf16[2,8,256], index: 19, kind: output, shape index: {0}]
  %s20 = inlined_call_operand.hbm [shape: bf16[2,8,256], index: 20, kind: output, shape index: {1}]
  %s21 = inlined_call_operand.hbm [shape: bf16[2,8,256], index: 21, kind: output, shape index: {2}]
  %s22 = inlined_call_operand.hbm [shape: bf16[2,8,256], index: 22, kind: output, shape index: {3}]
  %23 = xla_tuple %s19, %s20, %s21, %s22
  %s24 = sld [smem:[#allocation0]]
  $region165: #{tpu_custom_call.1} parent=0
    _
  %s26 = ssub.s32 1, %s24
  %s27 = scalar_select 0, %s26, %s24
  $region1: #{tpu_custom_call.1} parent=0
    #allocation2 [shape = 'u8[4096]{0}', space=vmem, size = 0x1000, scoped, tag = 'input window, operand 0']
    #allocation3 [shape = 's32[2]{0}', space=sflag, size = 0x8, scoped, tag = 'scoped memory for tpu_custom_call.1']
    #allocation4 [shape = 's32[2]{0}', space=sflag, size = 0x8, scoped, tag = 'scoped memory for tpu_custom_call.1']
    #allocation5 [shape = 'u8[16384]{0}', space=vmem, size = 0x4000, scoped, tag = 'input window, operand 4, single buffered']
    #allocation6 [shape = 's32[1]{0}', space=sflag, size = 0x4, scoped, tag = 'scoped memory for tpu_custom_call.1']
    #allocation7 [shape = 'u8[131072]{0}', space=vmem, size = 0x20000, scoped, tag = 'input window, operand 8, single buffered']
    #allocation8 [shape = 'u8[1024]{0}', space=vmem, size = 0x400, scoped, tag = 'input window, operand 11, single buffered']
    #allocation9 [shape = 's32[1]{0}', space=sflag, size = 0x4, scoped, tag = 'scoped memory for tpu_custom_call.1']
    #allocation10 [shape = 'u8[32768]{0}', space=vmem, size = 0x8000, scoped, tag = 'input window, operand 14, single buffered']
    #allocation11 [shape = 'u8[131072]{0}', space=vmem, size = 0x20000, scoped, tag = 'input window, operand 16, single buffered']
    #allocation12 [shape = 's32[1]{0}', space=sflag, size = 0x4, scoped, tag = 'scoped memory for tpu_custom_call.1']
    #allocation13 [shape = 'u8[131072]{0}', space=vmem, size = 0x20000, scoped, tag = 'input window, operand 17, single buffered']
    #allocation14 [shape = 'u8[131072]{0}', space=vmem, size = 0x20000, scoped, tag = 'input window, operand 18, single buffered']
    #allocation15 [shape = 's32[1]{0}', space=sflag, size = 0x4, scoped, tag = 'scoped memory for tpu_custom_call.1']
    #allocation16 [shape = 'u8[8192]{0}', space=vmem, size = 0x2000, scoped, tag = 'output window, operand 0']
    #allocation17 [shape = 'u8[8192]{0}', space=vmem, size = 0x2000, scoped, tag = 'output window, operand 1']
    #allocation18 [shape = 's32[2]{0}', space=sflag, size = 0x8, scoped, tag = 'scoped memory for tpu_custom_call.1']
    #allocation19 [shape = 'u8[8192]{0}', space=vmem, size = 0x2000, scoped, tag = 'output window, operand 2']
    #allocation20 [shape = 'u8[8192]{0}', space=vmem, size = 0x2000, scoped, tag = 'output window, operand 3']
    #allocation21 [shape = 's32[2]{0}', space=sflag, size = 0x8, scoped, tag = 'scoped memory for tpu_custom_call.1']
    %28 = vsyncpa [#allocation3], 0
    %s29 = scalar_lea.sflag [#allocation3], 1
    %30 = vsyncpa %s29, 0
    %31 = vsyncpa [#allocation6], 0
    %32 = vsyncpa [#allocation9], 0
    %33 = vsyncpa [#allocation12], 0
    %34 = vsyncpa [#allocation15], 0
    %35 = vsyncpa [#allocation4], 0
    %s36 = scalar_lea.sflag [#allocation4], 1
    %37 = vsyncpa %s36, 0
    %38 = vsyncpa [#allocation18], 0
    %s39 = scalar_lea.sflag [#allocation18], 1
    %40 = vsyncpa %s39, 0
    %41 = vsyncpa [#allocation21], 0
    %s42 = scalar_lea.sflag [#allocation21], 1
    %43 = vsyncpa %s42, 0
    loop: start=0, step=1, limit=4
    $region2: #{tpu_custom_call.1} parent=1 // loop_pre_header
      _
    $region3: #{tpu_custom_call.1} parent=1 // loop_header
      %s45 = sphi 0, %s49
      %p46 = scmp.ge.s32.totalorder %s45, 4
      %s55 = sphi 0, %s57
      %s58 = sphi 0, %s55
      %s59 = sphi 0, %s58
      %s75 = sphi 0, %s59
      %s81 = sphi 0, %s83
      %s84 = sphi 0, %s81
      %s85 = sphi 0, %s84
      %s101 = sphi 0, %s85
      %s107 = sphi 0, %s109
      %s110 = sphi 0, %s107
      %s111 = sphi 0, %s110
      %s127 = sphi 0, %s111
      %s131 = sphi 0, %s131
      %s133 = sphi 0, %s131
      %s134 = sphi 0, %s133
      %s148 = sphi 0, %s134
      %s152 = sphi 0, %s152
      %s154 = sphi 0, %s152
      %s155 = sphi 0, %s154
      %s169 = sphi 0, %s155
      %s173 = sphi 0, %s173
      %s175 = sphi 0, %s173
      %s176 = sphi 0, %s175
      %s190 = sphi 0, %s176
      %s194 = sphi 0, %s194
      %s196 = sphi 0, %s194
      %s197 = sphi 0, %s196
      %s211 = sphi 0, %s197
      %s215 = sphi 0, %s215
      %s217 = sphi 0, %s215
      %s218 = sphi 0, %s217
      %s232 = sphi 0, %s218
      %s236 = sphi 0, %s236
      %s238 = sphi 0, %s236
      %s239 = sphi 0, %s238
      %s253 = sphi 0, %s239
      %s257 = sphi 0, %s257
      %s259 = sphi 0, %s257
      %s260 = sphi 0, %s259
      %s274 = sphi 0, %s260
      %s278 = sphi 0, %s278
      %s280 = sphi 0, %s278
      %s281 = sphi 0, %s280
      %s295 = sphi 0, %s281
      %s299 = sphi 0, %s299
      %s301 = sphi 0, %s299
      %s302 = sphi 0, %s301
      %s316 = sphi 0, %s302
      %s320 = sphi 0, %s320
      %s322 = sphi 0, %s320
      %s323 = sphi 0, %s322
      %s337 = sphi 0, %s323
      %s341 = sphi 0, %s341
      %s343 = sphi 0, %s341
      %s344 = sphi 0, %s343
      %s358 = sphi 0, %s344
      %s362 = sphi 0, %s362
      %s364 = sphi 0, %s362
      %s365 = sphi 0, %s364
      %s379 = sphi 0, %s365
      %s383 = sphi 0, %s383
      %s385 = sphi 0, %s383
      %s386 = sphi 0, %s385
      %s400 = sphi 0, %s386
      %s404 = sphi 0, %s404
      %s406 = sphi 0, %s404
      %s407 = sphi 0, %s406
      %s421 = sphi 0, %s407
      %s425 = sphi 0, %s425
      %s427 = sphi 0, %s425
      %s428 = sphi 0, %s427
      %s442 = sphi 0, %s428
      %s446 = sphi 0, %s446
      %s448 = sphi 0, %s446
      %s449 = sphi 0, %s448
      %s463 = sphi 0, %s449
      %s469 = sphi 0, %s471
      %s472 = sphi 0, %s469
      %s473 = sphi 0, %s472
      %s489 = sphi 0, %s473
      %s495 = sphi 0, %s497
      %s498 = sphi 0, %s495
      %s499 = sphi 0, %s498
      %s515 = sphi 0, %s499
      %s521 = sphi 0, %s523
      %s524 = sphi 0, %s521
      %s525 = sphi 0, %s524
      %s541 = sphi 0, %s525
      %s547 = sphi 0, %s549
      %s550 = sphi 0, %s547
      %s551 = sphi 0, %s550
      %s567 = sphi 0, %s551
    $region4: #{tpu_custom_call.1} parent=1 // loop_header_branch
      %48 = sbr.rel (%p46) target = $region8
    $region5: #{tpu_custom_call.1} parent=1 // loop_body
      %s50 = ssub.s32 %s45, 1
      %s51 = ssub.s32 %s45, 2
      %s52 = sadd.s32 %s45, 1
      %s53 = ssub.s32 %s45, %s52
      %p54 = scmp.eq.s32.totalorder %s53, 0
      %s56 = sadd.s32 %s55, 1
      %s57 = scalar_select %p54, %s55, %s56
      %p60 = pneg %p54
      %p61 = scmp.eq.s32.totalorder %s45, 1
      %p62 = por %p60, %p61
      %p63 = scmp.ne.s32.totalorder %s55, %s58
      %p64 = scmp.eq.s32.totalorder %s45, 0
      %p65 = por %p63, %p64
      %p66 = scmp.ne.s32.totalorder %s55, %s58
      %p67 = scmp.eq.s32.totalorder %s50, 1
      %p68 = por %p66, %p67
      %p69 = scmp.ne.s32.totalorder %s58, %s59
      %p70 = scmp.eq.s32.totalorder %s50, 0
      %p71 = por %p69, %p70
      %p72 = scmp.ne.s32.totalorder %s58, %s59
      %p73 = scmp.eq.s32.totalorder %s51, 1
      %p74 = por %p72, %p73
      %p76 = scmp.ne.s32.totalorder %s59, %s75
      %p77 = scmp.eq.s32.totalorder %s51, 0
      %p78 = por %p76, %p77
      %s79 = ssub.s32 %s45, %s52
      %p80 = scmp.eq.s32.totalorder %s79, 0
      %s82 = sadd.s32 %s81, 1
      %s83 = scalar_select %p80, %s81, %s82
      %p86 = pneg %p80
      %p87 = scmp.eq.s32.totalorder %s45, 1
      %p88 = por %p86, %p87
      %p89 = scmp.ne.s32.totalorder %s81, %s84
      %p90 = scmp.eq.s32.totalorder %s45, 0
      %p91 = por %p89, %p90
      %p92 = scmp.ne.s32.totalorder %s81, %s84
      %p93 = scmp.eq.s32.totalorder %s50, 1
      %p94 = por %p92, %p93
      %p95 = scmp.ne.s32.totalorder %s84, %s85
      %p96 = scmp.eq.s32.totalorder %s50, 0
      %p97 = por %p95, %p96
      %p98 = scmp.ne.s32.totalorder %s84, %s85
      %p99 = scmp.eq.s32.totalorder %s51, 1
      %p100 = por %p98, %p99
      %p102 = scmp.ne.s32.totalorder %s85, %s101
      %p103 = scmp.eq.s32.totalorder %s51, 0
      %p104 = por %p102, %p103
      %s105 = ssub.s32 %s45, %s52
      %p106 = scmp.eq.s32.totalorder %s105, 0
      %s108 = sadd.s32 %s107, 1
      %s109 = scalar_select %p106, %s107, %s108
      %p112 = pneg %p106
      %p113 = scmp.eq.s32.totalorder %s45, 1
      %p114 = por %p112, %p113
      %p115 = scmp.ne.s32.totalorder %s107, %s110
      %p116 = scmp.eq.s32.totalorder %s45, 0
      %p117 = por %p115, %p116
      %p118 = scmp.ne.s32.totalorder %s107, %s110
      %p119 = scmp.eq.s32.totalorder %s50, 1
      %p120 = por %p118, %p119
      %p121 = scmp.ne.s32.totalorder %s110, %s111
      %p122 = scmp.eq.s32.totalorder %s50, 0
      %p123 = por %p121, %p122
      %p124 = scmp.ne.s32.totalorder %s110, %s111
      %p125 = scmp.eq.s32.totalorder %s51, 1
      %p126 = por %p124, %p125
      %p128 = scmp.ne.s32.totalorder %s111, %s127
      %p129 = scmp.eq.s32.totalorder %s51, 0
      %p130 = por %p128, %p129
      %s132 = sadd.s32 %s131, 1
      %p135 = scmp.eq.s32.totalorder %s45, 1
      %p136 = scmp.ne.s32.totalorder %s131, %s133
      %p137 = scmp.eq.s32.totalorder %s45, 0
      %p138 = por %p136, %p137
      %p139 = scmp.ne.s32.totalorder %s131, %s133
      %p140 = scmp.eq.s32.totalorder %s50, 1
      %p141 = por %p139, %p140
      %p142 = scmp.ne.s32.totalorder %s133, %s134
      %p143 = scmp.eq.s32.totalorder %s50, 0
      %p144 = por %p142, %p143
      %p145 = scmp.ne.s32.totalorder %s133, %s134
      %p146 = scmp.eq.s32.totalorder %s51, 1
      %p147 = por %p145, %p146
      %p149 = scmp.ne.s32.totalorder %s134, %s148
      %p150 = scmp.eq.s32.totalorder %s51, 0
      %p151 = por %p149, %p150
      %s153 = sadd.s32 %s152, 1
      %p156 = scmp.eq.s32.totalorder %s45, 1
      %p157 = scmp.ne.s32.totalorder %s152, %s154
      %p158 = scmp.eq.s32.totalorder %s45, 0
      %p159 = por %p157, %p158
      %p160 = scmp.ne.s32.totalorder %s152, %s154
      %p161 = scmp.eq.s32.totalorder %s50, 1
      %p162 = por %p160, %p161
      %p163 = scmp.ne.s32.totalorder %s154, %s155
      %p164 = scmp.eq.s32.totalorder %s50, 0
      %p165 = por %p163, %p164
      %p166 = scmp.ne.s32.totalorder %s154, %s155
      %p167 = scmp.eq.s32.totalorder %s51, 1
      %p168 = por %p166, %p167
      %p170 = scmp.ne.s32.totalorder %s155, %s169
      %p171 = scmp.eq.s32.totalorder %s51, 0
      %p172 = por %p170, %p171
      %s174 = sadd.s32 %s173, 1
      %p177 = scmp.eq.s32.totalorder %s45, 1
      %p178 = scmp.ne.s32.totalorder %s173, %s175
      %p179 = scmp.eq.s32.totalorder %s45, 0
      %p180 = por %p178, %p179
      %p181 = scmp.ne.s32.totalorder %s173, %s175
      %p182 = scmp.eq.s32.totalorder %s50, 1
      %p183 = por %p181, %p182
      %p184 = scmp.ne.s32.totalorder %s175, %s176
      %p185 = scmp.eq.s32.totalorder %s50, 0
      %p186 = por %p184, %p185
      %p187 = scmp.ne.s32.totalorder %s175, %s176
      %p188 = scmp.eq.s32.totalorder %s51, 1
      %p189 = por %p187, %p188
      %p191 = scmp.ne.s32.totalorder %s176, %s190
      %p192 = scmp.eq.s32.totalorder %s51, 0
      %p193 = por %p191, %p192
      %s195 = sadd.s32 %s194, 1
      %p198 = scmp.eq.s32.totalorder %s45, 1
      %p199 = scmp.ne.s32.totalorder %s194, %s196
      %p200 = scmp.eq.s32.totalorder %s45, 0
      %p201 = por %p199, %p200
      %p202 = scmp.ne.s32.totalorder %s194, %s196
      %p203 = scmp.eq.s32.totalorder %s50, 1
      %p204 = por %p202, %p203
      %p205 = scmp.ne.s32.totalorder %s196, %s197
      %p206 = scmp.eq.s32.totalorder %s50, 0
      %p207 = por %p205, %p206
      %p208 = scmp.ne.s32.totalorder %s196, %s197
      %p209 = scmp.eq.s32.totalorder %s51, 1
      %p210 = por %p208, %p209
      %p212 = scmp.ne.s32.totalorder %s197, %s211
      %p213 = scmp.eq.s32.totalorder %s51, 0
      %p214 = por %p212, %p213
      %s216 = sadd.s32 %s215, 1
      %p219 = scmp.eq.s32.totalorder %s45, 1
      %p220 = scmp.ne.s32.totalorder %s215, %s217
      %p221 = scmp.eq.s32.totalorder %s45, 0
      %p222 = por %p220, %p221
      %p223 = scmp.ne.s32.totalorder %s215, %s217
      %p224 = scmp.eq.s32.totalorder %s50, 1
      %p225 = por %p223, %p224
      %p226 = scmp.ne.s32.totalorder %s217, %s218
      %p227 = scmp.eq.s32.totalorder %s50, 0
      %p228 = por %p226, %p227
      %p229 = scmp.ne.s32.totalorder %s217, %s218
      %p230 = scmp.eq.s32.totalorder %s51, 1
      %p231 = por %p229, %p230
      %p233 = scmp.ne.s32.totalorder %s218, %s232
      %p234 = scmp.eq.s32.totalorder %s51, 0
      %p235 = por %p233, %p234
      %s237 = sadd.s32 %s236, 1
      %p240 = scmp.eq.s32.totalorder %s45, 1
      %p241 = scmp.ne.s32.totalorder %s236, %s238
      %p242 = scmp.eq.s32.totalorder %s45, 0
      %p243 = por %p241, %p242
      %p244 = scmp.ne.s32.totalorder %s236, %s238
      %p245 = scmp.eq.s32.totalorder %s50, 1
      %p246 = por %p244, %p245
      %p247 = scmp.ne.s32.totalorder %s238, %s239
      %p248 = scmp.eq.s32.totalorder %s50, 0
      %p249 = por %p247, %p248
      %p250 = scmp.ne.s32.totalorder %s238, %s239
      %p251 = scmp.eq.s32.totalorder %s51, 1
      %p252 = por %p250, %p251
      %p254 = scmp.ne.s32.totalorder %s239, %s253
      %p255 = scmp.eq.s32.totalorder %s51, 0
      %p256 = por %p254, %p255
      %s258 = sadd.s32 %s257, 1
      %p261 = scmp.eq.s32.totalorder %s45, 1
      %p262 = scmp.ne.s32.totalorder %s257, %s259
      %p263 = scmp.eq.s32.totalorder %s45, 0
      %p264 = por %p262, %p263
      %p265 = scmp.ne.s32.totalorder %s257, %s259
      %p266 = scmp.eq.s32.totalorder %s50, 1
      %p267 = por %p265, %p266
      %p268 = scmp.ne.s32.totalorder %s259, %s260
      %p269 = scmp.eq.s32.totalorder %s50, 0
      %p270 = por %p268, %p269
      %p271 = scmp.ne.s32.totalorder %s259, %s260
      %p272 = scmp.eq.s32.totalorder %s51, 1
      %p273 = por %p271, %p272
      %p275 = scmp.ne.s32.totalorder %s260, %s274
      %p276 = scmp.eq.s32.totalorder %s51, 0
      %p277 = por %p275, %p276
      %s279 = sadd.s32 %s278, 1
      %p282 = scmp.eq.s32.totalorder %s45, 1
      %p283 = scmp.ne.s32.totalorder %s278, %s280
      %p284 = scmp.eq.s32.totalorder %s45, 0
      %p285 = por %p283, %p284
      %p286 = scmp.ne.s32.totalorder %s278, %s280
      %p287 = scmp.eq.s32.totalorder %s50, 1
      %p288 = por %p286, %p287
      %p289 = scmp.ne.s32.totalorder %s280, %s281
      %p290 = scmp.eq.s32.totalorder %s50, 0
      %p291 = por %p289, %p290
      %p292 = scmp.ne.s32.totalorder %s280, %s281
      %p293 = scmp.eq.s32.totalorder %s51, 1
      %p294 = por %p292, %p293
      %p296 = scmp.ne.s32.totalorder %s281, %s295
      %p297 = scmp.eq.s32.totalorder %s51, 0
      %p298 = por %p296, %p297
      %s300 = sadd.s32 %s299, 1
      %p303 = scmp.eq.s32.totalorder %s45, 1
      %p304 = scmp.ne.s32.totalorder %s299, %s301
      %p305 = scmp.eq.s32.totalorder %s45, 0
      %p306 = por %p304, %p305
      %p307 = scmp.ne.s32.totalorder %s299, %s301
      %p308 = scmp.eq.s32.totalorder %s50, 1
      %p309 = por %p307, %p308
      %p310 = scmp.ne.s32.totalorder %s301, %s302
      %p311 = scmp.eq.s32.totalorder %s50, 0
      %p312 = por %p310, %p311
      %p313 = scmp.ne.s32.totalorder %s301, %s302
      %p314 = scmp.eq.s32.totalorder %s51, 1
      %p315 = por %p313, %p314
      %p317 = scmp.ne.s32.totalorder %s302, %s316
      %p318 = scmp.eq.s32.totalorder %s51, 0
      %p319 = por %p317, %p318
      %s321 = sadd.s32 %s320, 1
      %p324 = scmp.eq.s32.totalorder %s45, 1
      %p325 = scmp.ne.s32.totalorder %s320, %s322
      %p326 = scmp.eq.s32.totalorder %s45, 0
      %p327 = por %p325, %p326
      %p328 = scmp.ne.s32.totalorder %s320, %s322
      %p329 = scmp.eq.s32.totalorder %s50, 1
      %p330 = por %p328, %p329
      %p331 = scmp.ne.s32.totalorder %s322, %s323
      %p332 = scmp.eq.s32.totalorder %s50, 0
      %p333 = por %p331, %p332
      %p334 = scmp.ne.s32.totalorder %s322, %s323
      %p335 = scmp.eq.s32.totalorder %s51, 1
      %p336 = por %p334, %p335
      %p338 = scmp.ne.s32.totalorder %s323, %s337
      %p339 = scmp.eq.s32.totalorder %s51, 0
      %p340 = por %p338, %p339
      %s342 = sadd.s32 %s341, 1
      %p345 = scmp.eq.s32.totalorder %s45, 1
      %p346 = scmp.ne.s32.totalorder %s341, %s343
      %p347 = scmp.eq.s32.totalorder %s45, 0
      %p348 = por %p346, %p347
      %p349 = scmp.ne.s32.totalorder %s341, %s343
      %p350 = scmp.eq.s32.totalorder %s50, 1
      %p351 = por %p349, %p350
      %p352 = scmp.ne.s32.totalorder %s343, %s344
      %p353 = scmp.eq.s32.totalorder %s50, 0
      %p354 = por %p352, %p353
      %p355 = scmp.ne.s32.totalorder %s343, %s344
      %p356 = scmp.eq.s32.totalorder %s51, 1
      %p357 = por %p355, %p356
      %p359 = scmp.ne.s32.totalorder %s344, %s358
      %p360 = scmp.eq.s32.totalorder %s51, 0
      %p361 = por %p359, %p360
      %s363 = sadd.s32 %s362, 1
      %p366 = scmp.eq.s32.totalorder %s45, 1
      %p367 = scmp.ne.s32.totalorder %s362, %s364
      %p368 = scmp.eq.s32.totalorder %s45, 0
      %p369 = por %p367, %p368
      %p370 = scmp.ne.s32.totalorder %s362, %s364
      %p371 = scmp.eq.s32.totalorder %s50, 1
      %p372 = por %p370, %p371
      %p373 = scmp.ne.s32.totalorder %s364, %s365
      %p374 = scmp.eq.s32.totalorder %s50, 0
      %p375 = por %p373, %p374
      %p376 = scmp.ne.s32.totalorder %s364, %s365
      %p377 = scmp.eq.s32.totalorder %s51, 1
      %p378 = por %p376, %p377
      %p380 = scmp.ne.s32.totalorder %s365, %s379
      %p381 = scmp.eq.s32.totalorder %s51, 0
      %p382 = por %p380, %p381
      %s384 = sadd.s32 %s383, 1
      %p387 = scmp.eq.s32.totalorder %s45, 1
      %p388 = scmp.ne.s32.totalorder %s383, %s385
      %p389 = scmp.eq.s32.totalorder %s45, 0
      %p390 = por %p388, %p389
      %p391 = scmp.ne.s32.totalorder %s383, %s385
      %p392 = scmp.eq.s32.totalorder %s50, 1
      %p393 = por %p391, %p392
      %p394 = scmp.ne.s32.totalorder %s385, %s386
      %p395 = scmp.eq.s32.totalorder %s50, 0
      %p396 = por %p394, %p395
      %p397 = scmp.ne.s32.totalorder %s385, %s386
      %p398 = scmp.eq.s32.totalorder %s51, 1
      %p399 = por %p397, %p398
      %p401 = scmp.ne.s32.totalorder %s386, %s400
      %p402 = scmp.eq.s32.totalorder %s51, 0
      %p403 = por %p401, %p402
      %s405 = sadd.s32 %s404, 1
      %p408 = scmp.eq.s32.totalorder %s45, 1
      %p409 = scmp.ne.s32.totalorder %s404, %s406
      %p410 = scmp.eq.s32.totalorder %s45, 0
      %p411 = por %p409, %p410
      %p412 = scmp.ne.s32.totalorder %s404, %s406
      %p413 = scmp.eq.s32.totalorder %s50, 1
      %p414 = por %p412, %p413
      %p415 = scmp.ne.s32.totalorder %s406, %s407
      %p416 = scmp.eq.s32.totalorder %s50, 0
      %p417 = por %p415, %p416
      %p418 = scmp.ne.s32.totalorder %s406, %s407
      %p419 = scmp.eq.s32.totalorder %s51, 1
      %p420 = por %p418, %p419
      %p422 = scmp.ne.s32.totalorder %s407, %s421
      %p423 = scmp.eq.s32.totalorder %s51, 0
      %p424 = por %p422, %p423
      %s426 = sadd.s32 %s425, 1
      %p429 = scmp.eq.s32.totalorder %s45, 1
      %p430 = scmp.ne.s32.totalorder %s425, %s427
      %p431 = scmp.eq.s32.totalorder %s45, 0
      %p432 = por %p430, %p431
      %p433 = scmp.ne.s32.totalorder %s425, %s427
      %p434 = scmp.eq.s32.totalorder %s50, 1
      %p435 = por %p433, %p434
      %p436 = scmp.ne.s32.totalorder %s427, %s428
      %p437 = scmp.eq.s32.totalorder %s50, 0
      %p438 = por %p436, %p437
      %p439 = scmp.ne.s32.totalorder %s427, %s428
      %p440 = scmp.eq.s32.totalorder %s51, 1
      %p441 = por %p439, %p440
      %p443 = scmp.ne.s32.totalorder %s428, %s442
      %p444 = scmp.eq.s32.totalorder %s51, 0
      %p445 = por %p443, %p444
      %s447 = sadd.s32 %s446, 1
      %p450 = scmp.eq.s32.totalorder %s45, 1
      %p451 = scmp.ne.s32.totalorder %s446, %s448
      %p452 = scmp.eq.s32.totalorder %s45, 0
      %p453 = por %p451, %p452
      %p454 = scmp.ne.s32.totalorder %s446, %s448
      %p455 = scmp.eq.s32.totalorder %s50, 1
      %p456 = por %p454, %p455
      %p457 = scmp.ne.s32.totalorder %s448, %s449
      %p458 = scmp.eq.s32.totalorder %s50, 0
      %p459 = por %p457, %p458
      %p460 = scmp.ne.s32.totalorder %s448, %s449
      %p461 = scmp.eq.s32.totalorder %s51, 1
      %p462 = por %p460, %p461
      %p464 = scmp.ne.s32.totalorder %s449, %s463
      %p465 = scmp.eq.s32.totalorder %s51, 0
      %p466 = por %p464, %p465
      %s467 = ssub.s32 %s45, %s52
      %p468 = scmp.eq.s32.totalorder %s467, 0
      %s470 = sadd.s32 %s469, 1
      %s471 = scalar_select %p468, %s469, %s470
      %p474 = pneg %p468
      %p475 = scmp.eq.s32.totalorder %s45, 1
      %p476 = por %p474, %p475
      %p477 = scmp.ne.s32.totalorder %s469, %s472
      %p478 = scmp.eq.s32.totalorder %s45, 0
      %p479 = por %p477, %p478
      %p480 = scmp.ne.s32.totalorder %s469, %s472
      %p481 = scmp.eq.s32.totalorder %s50, 1
      %p482 = por %p480, %p481
      %p483 = scmp.ne.s32.totalorder %s472, %s473
      %p484 = scmp.eq.s32.totalorder %s50, 0
      %p485 = por %p483, %p484
      %p486 = scmp.ne.s32.totalorder %s472, %s473
      %p487 = scmp.eq.s32.totalorder %s51, 1
      %p488 = por %p486, %p487
      %p490 = scmp.ne.s32.totalorder %s473, %s489
      %p491 = scmp.eq.s32.totalorder %s51, 0
      %p492 = por %p490, %p491
      %s493 = ssub.s32 %s45, %s52
      %p494 = scmp.eq.s32.totalorder %s493, 0
      %s496 = sadd.s32 %s495, 1
      %s497 = scalar_select %p494, %s495, %s496
      %p500 = pneg %p494
      %p501 = scmp.eq.s32.totalorder %s45, 1
      %p502 = por %p500, %p501
      %p503 = scmp.ne.s32.totalorder %s495, %s498
      %p504 = scmp.eq.s32.totalorder %s45, 0
      %p505 = por %p503, %p504
      %p506 = scmp.ne.s32.totalorder %s495, %s498
      %p507 = scmp.eq.s32.totalorder %s50, 1
      %p508 = por %p506, %p507
      %p509 = scmp.ne.s32.totalorder %s498, %s499
      %p510 = scmp.eq.s32.totalorder %s50, 0
      %p511 = por %p509, %p510
      %p512 = scmp.ne.s32.totalorder %s498, %s499
      %p513 = scmp.eq.s32.totalorder %s51, 1
      %p514 = por %p512, %p513
      %p516 = scmp.ne.s32.totalorder %s499, %s515
      %p517 = scmp.eq.s32.totalorder %s51, 0
      %p518 = por %p516, %p517
      %s519 = ssub.s32 %s45, %s52
      %p520 = scmp.eq.s32.totalorder %s519, 0
      %s522 = sadd.s32 %s521, 1
      %s523 = scalar_select %p520, %s521, %s522
      %p526 = pneg %p520
      %p527 = scmp.eq.s32.totalorder %s45, 1
      %p528 = por %p526, %p527
      %p529 = scmp.ne.s32.totalorder %s521, %s524
      %p530 = scmp.eq.s32.totalorder %s45, 0
      %p531 = por %p529, %p530
      %p532 = scmp.ne.s32.totalorder %s521, %s524
      %p533 = scmp.eq.s32.totalorder %s50, 1
      %p534 = por %p532, %p533
      %p535 = scmp.ne.s32.totalorder %s524, %s525
      %p536 = scmp.eq.s32.totalorder %s50, 0
      %p537 = por %p535, %p536
      %p538 = scmp.ne.s32.totalorder %s524, %s525
      %p539 = scmp.eq.s32.totalorder %s51, 1
      %p540 = por %p538, %p539
      %p542 = scmp.ne.s32.totalorder %s525, %s541
      %p543 = scmp.eq.s32.totalorder %s51, 0
      %p544 = por %p542, %p543
      %s545 = ssub.s32 %s45, %s52
      %p546 = scmp.eq.s32.totalorder %s545, 0
      %s548 = sadd.s32 %s547, 1
      %s549 = scalar_select %p546, %s547, %s548
      %p552 = pneg %p546
      %p553 = scmp.eq.s32.totalorder %s45, 1
      %p554 = por %p552, %p553
      %p555 = scmp.ne.s32.totalorder %s547, %s550
      %p556 = scmp.eq.s32.totalorder %s45, 0
      %p557 = por %p555, %p556
      %p558 = scmp.ne.s32.totalorder %s547, %s550
      %p559 = scmp.eq.s32.totalorder %s50, 1
      %p560 = por %p558, %p559
      %p561 = scmp.ne.s32.totalorder %s550, %s551
      %p562 = scmp.eq.s32.totalorder %s50, 0
      %p563 = por %p561, %p562
      %p564 = scmp.ne.s32.totalorder %s550, %s551
      %p565 = scmp.eq.s32.totalorder %s51, 1
      %p566 = por %p564, %p565
      %p568 = scmp.ne.s32.totalorder %s551, %s567
      %p569 = scmp.eq.s32.totalorder %s51, 0
      %p570 = por %p568, %p569
      %p571 = scmp.le.s32.totalorder 1, %s45
      %p572 = scmp.lt.s32.totalorder %s45, 3
      %p573 = pnand %p571, %p572
      %p574 = pneg %p573
      // Predicated region
      $region9: #{tpu_custom_call.1} parent=5 // pred_check
        _
      $region10: #{tpu_custom_call.1} parent=5 // pred_check_branch
        %576 = sbr.rel (%p573) target = $region12
      $region11: #{tpu_custom_call.1} parent=5 // pred_region
        %s577 = ssub.s32 %s45, 1
        // Predicated region
        $region13: #{tpu_custom_call.1} parent=11 // pred_check
          %p578 = pneg %p144
        $region14: #{tpu_custom_call.1} parent=11 // pred_check_branch
          %580 = sbr.rel (%p578) target = $region16
        $region15: #{tpu_custom_call.1} parent=11 // pred_region
          _
        $region16: #{tpu_custom_call.1} parent=11 // pred_fallthru
          _
        // Predicated region
        $region17: #{tpu_custom_call.1} parent=11 // pred_check
          %p581 = pneg %p165
        $region18: #{tpu_custom_call.1} parent=11 // pred_check_branch
          %583 = sbr.rel (%p581) target = $region20
        $region19: #{tpu_custom_call.1} parent=11 // pred_region
          %585 = vsyncadd [#allocation6], 0
          %s586 = sshll.u32 %s4, 4
          %s587 = int_to_ptr.hbm [resolvable:$true] %s586
          %s588 = sshll.u32 [#allocation5], 4
          %s589 = int_to_ptr.vmem [resolvable:$true] %s588
          %594 = dma.hbm_to_vmem [thread:$0]  %s587, 512, %s589, [#allocation6], 128, 128, 8
        $region20: #{tpu_custom_call.1} parent=11 // pred_fallthru
          _
        // Predicated region
        $region21: #{tpu_custom_call.1} parent=11 // pred_check
          %p595 = pneg %p186
        $region22: #{tpu_custom_call.1} parent=11 // pred_check_branch
          %597 = sbr.rel (%p595) target = $region24
        $region23: #{tpu_custom_call.1} parent=11 // pred_region
          _
        $region24: #{tpu_custom_call.1} parent=11 // pred_fallthru
          _
        // Predicated region
        $region25: #{tpu_custom_call.1} parent=11 // pred_check
          %p598 = pneg %p207
        $region26: #{tpu_custom_call.1} parent=11 // pred_check_branch
          %600 = sbr.rel (%p598) target = $region28
        $region27: #{tpu_custom_call.1} parent=11 // pred_region
          _
        $region28: #{tpu_custom_call.1} parent=11 // pred_fallthru
          _
        // Predicated region
        $region29: #{tpu_custom_call.1} parent=11 // pred_check
          %p601 = pneg %p228
        $region30: #{tpu_custom_call.1} parent=11 // pred_check_branch
          %603 = sbr.rel (%p601) target = $region32
        $region31: #{tpu_custom_call.1} parent=11 // pred_region
          _
        $region32: #{tpu_custom_call.1} parent=11 // pred_fallthru
          _
        // Predicated region
        $region33: #{tpu_custom_call.1} parent=11 // pred_check
          %p604 = pneg %p249
        $region34: #{tpu_custom_call.1} parent=11 // pred_check_branch
          %606 = sbr.rel (%p604) target = $region36
        $region35: #{tpu_custom_call.1} parent=11 // pred_region
          %608 = vsyncadd [#allocation6], 0
          %s609 = sshll.u32 %s8, 4
          %s610 = int_to_ptr.hbm [resolvable:$true] %s609
          %s611 = sshll.u32 [#allocation7], 4
          %s612 = int_to_ptr.vmem [resolvable:$true] %s611
          %617 = dma.hbm_to_vmem [thread:$0]  %s610, 4096, %s612, [#allocation6], 128, 128, 8
        $region36: #{tpu_custom_call.1} parent=11 // pred_fallthru
          _
        // Predicated region
        $region37: #{tpu_custom_call.1} parent=11 // pred_check
          %p618 = pneg %p270
        $region38: #{tpu_custom_call.1} parent=11 // pred_check_branch
          %620 = sbr.rel (%p618) target = $region40
        $region39: #{tpu_custom_call.1} parent=11 // pred_region
          _
        $region40: #{tpu_custom_call.1} parent=11 // pred_fallthru
          _
        // Predicated region
        $region41: #{tpu_custom_call.1} parent=11 // pred_check
          %p621 = pneg %p291
        $region42: #{tpu_custom_call.1} parent=11 // pred_check_branch
          %623 = sbr.rel (%p621) target = $region44
        $region43: #{tpu_custom_call.1} parent=11 // pred_region
          _
        $region44: #{tpu_custom_call.1} parent=11 // pred_fallthru
          _
        // Predicated region
        $region45: #{tpu_custom_call.1} parent=11 // pred_check
          %p624 = pneg %p312
        $region46: #{tpu_custom_call.1} parent=11 // pred_check_branch
          %626 = sbr.rel (%p624) target = $region48
        $region47: #{tpu_custom_call.1} parent=11 // pred_region
          %628 = vsyncadd [#allocation9], 0
          %s630 = sshll.u32 %s11, 4
          %s631 = int_to_ptr.hbm [resolvable:$true] %s630
          %s632 = sshll.u32 [#allocation8], 4
          %s633 = int_to_ptr.vmem [resolvable:$true] %s632
          %635 = dma.hbm_to_vmem [thread:$0]  %s631, 32, %s633, [#allocation9]
        $region48: #{tpu_custom_call.1} parent=11 // pred_fallthru
          _
        // Predicated region
        $region49: #{tpu_custom_call.1} parent=11 // pred_check
          %p636 = pneg %p333
        $region50: #{tpu_custom_call.1} parent=11 // pred_check_branch
          %638 = sbr.rel (%p636) target = $region52
        $region51: #{tpu_custom_call.1} parent=11 // pred_region
          _
        $region52: #{tpu_custom_call.1} parent=11 // pred_fallthru
          _
        // Predicated region
        $region53: #{tpu_custom_call.1} parent=11 // pred_check
          %p639 = pneg %p354
        $region54: #{tpu_custom_call.1} parent=11 // pred_check_branch
          %641 = sbr.rel (%p639) target = $region56
        $region55: #{tpu_custom_call.1} parent=11 // pred_region
          _
        $region56: #{tpu_custom_call.1} parent=11 // pred_fallthru
          _
        // Predicated region
        $region57: #{tpu_custom_call.1} parent=11 // pred_check
          %p642 = pneg %p375
        $region58: #{tpu_custom_call.1} parent=11 // pred_check_branch
          %644 = sbr.rel (%p642) target = $region60
        $region59: #{tpu_custom_call.1} parent=11 // pred_region
          %646 = vsyncadd [#allocation9], 0
          %s647 = sshll.u32 %s14, 4
          %s648 = int_to_ptr.hbm [resolvable:$true] %s647
          %s649 = sshll.u32 [#allocation10], 4
          %s650 = int_to_ptr.vmem [resolvable:$true] %s649
          %655 = dma.hbm_to_vmem [thread:$0]  %s648, 1024, %s650, [#allocation9], 128, 128, 8
        $region60: #{tpu_custom_call.1} parent=11 // pred_fallthru
          _
        // Predicated region
        $region61: #{tpu_custom_call.1} parent=11 // pred_check
          %p656 = pneg %p396
        $region62: #{tpu_custom_call.1} parent=11 // pred_check_branch
          %658 = sbr.rel (%p656) target = $region64
        $region63: #{tpu_custom_call.1} parent=11 // pred_region
          _
        $region64: #{tpu_custom_call.1} parent=11 // pred_fallthru
          _
        // Predicated region
        $region65: #{tpu_custom_call.1} parent=11 // pred_check
          %p659 = pneg %p417
        $region66: #{tpu_custom_call.1} parent=11 // pred_check_branch
          %661 = sbr.rel (%p659) target = $region68
        $region67: #{tpu_custom_call.1} parent=11 // pred_region
          %663 = vsyncadd [#allocation12], 0
          %s664 = sshll.u32 %s16, 4
          %s665 = int_to_ptr.hbm [resolvable:$true] %s664
          %s666 = sshll.u32 [#allocation11], 4
          %s667 = int_to_ptr.vmem [resolvable:$true] %s666
          %672 = dma.hbm_to_vmem [thread:$0]  %s665, 4096, %s667, [#allocation12], 128, 128, 8
        $region68: #{tpu_custom_call.1} parent=11 // pred_fallthru
          _
        // Predicated region
        $region69: #{tpu_custom_call.1} parent=11 // pred_check
          %p673 = pneg %p438
        $region70: #{tpu_custom_call.1} parent=11 // pred_check_branch
          %675 = sbr.rel (%p673) target = $region72
        $region71: #{tpu_custom_call.1} parent=11 // pred_region
          %677 = vsyncadd [#allocation12], 0
          %s678 = sshll.u32 %s17, 4
          %s679 = int_to_ptr.hbm [resolvable:$true] %s678
          %s680 = sshll.u32 [#allocation13], 4
          %s681 = int_to_ptr.vmem [resolvable:$true] %s680
          %686 = dma.hbm_to_vmem [thread:$0]  %s679, 4096, %s681, [#allocation12], 128, 128, 8
        $region72: #{tpu_custom_call.1} parent=11 // pred_fallthru
          _
        // Predicated region
        $region73: #{tpu_custom_call.1} parent=11 // pred_check
          %p687 = pneg %p459
        $region74: #{tpu_custom_call.1} parent=11 // pred_check_branch
          %689 = sbr.rel (%p687) target = $region76
        $region75: #{tpu_custom_call.1} parent=11 // pred_region
          %691 = vsyncadd [#allocation15], 0
          %s692 = sshll.u32 %s18, 4
          %s693 = int_to_ptr.hbm [resolvable:$true] %s692
          %s694 = sshll.u32 [#allocation14], 4
          %s695 = int_to_ptr.vmem [resolvable:$true] %s694
          %700 = dma.hbm_to_vmem [thread:$0]  %s693, 4096, %s695, [#allocation15], 128, 128, 8
        $region76: #{tpu_custom_call.1} parent=11 // pred_fallthru
          _
      $region12: #{tpu_custom_call.1} parent=5 // pred_fallthru
        _
      %p701 = scmp.lt.s32.totalorder %s45, 2
      // Predicated region
      $region77: #{tpu_custom_call.1} parent=5 // pred_check
        %p702 = pneg %p701
      $region78: #{tpu_custom_call.1} parent=5 // pred_check_branch
        %704 = sbr.rel (%p702) target = $region80
      $region79: #{tpu_custom_call.1} parent=5 // pred_region
        // Predicated region
        $region81: #{tpu_custom_call.1} parent=79 // pred_check
          %p705 = pneg %p65
        $region82: #{tpu_custom_call.1} parent=79 // pred_check_branch
          %707 = sbr.rel (%p705) target = $region84
        $region83: #{tpu_custom_call.1} parent=79 // pred_region
          %s708 = sand.u32 %s55, 1
          %s709 = scalar_lea.sflag [#allocation3], %s708
          %s710 = sand.u32 %s55, 1
          %s711 = smul.addr %s710, 4
          %s712 = scalar_lea.vmem [#allocation2], %s711
          %714 = vsyncadd %s709, 0
          %s715 = smul.addr %s45, 4
          %s716 = scalar_lea.hbm %s0, %s715
          %s718 = sshll.u32 %s716, 4
          %s719 = int_to_ptr.hbm [resolvable:$true] %s718
          %s720 = sshll.u32 %s712, 4
          %s721 = int_to_ptr.vmem [resolvable:$true] %s720
          %723 = dma.hbm_to_vmem [thread:$0]  %s719, 64, %s721, %s709
        $region84: #{tpu_custom_call.1} parent=79 // pred_fallthru
          _
        // Predicated region
        $region85: #{tpu_custom_call.1} parent=79 // pred_check
          %p724 = pneg %p91
        $region86: #{tpu_custom_call.1} parent=79 // pred_check_branch
          %726 = sbr.rel (%p724) target = $region88
        $region87: #{tpu_custom_call.1} parent=79 // pred_region
          %p727 = scmp.lt.s32.totalorder %s45, 1
          %s728 = scalar_select %p727, %s45, 1
          %s729 = smul.addr %s728, 8
          %s730 = scalar_lea.vmem %s1, %s729
        $region88: #{tpu_custom_call.1} parent=79 // pred_fallthru
          _
        // Predicated region
        $region89: #{tpu_custom_call.1} parent=79 // pred_check
          %p731 = pneg %p117
        $region90: #{tpu_custom_call.1} parent=79 // pred_check_branch
          %733 = sbr.rel (%p731) target = $region92
        $region91: #{tpu_custom_call.1} parent=79 // pred_region
          %p734 = scmp.lt.s32.totalorder %s45, 1
          %s735 = scalar_select %p734, %s45, 1
          %s736 = scalar_lea.vmem %s2, %s735
        $region92: #{tpu_custom_call.1} parent=79 // pred_fallthru
          _
      $region80: #{tpu_custom_call.1} parent=5 // pred_fallthru
        _
      %p737 = scmp.le.s32.totalorder 1, %s45
      %p738 = scmp.lt.s32.totalorder %s45, 3
      %p739 = pnand %p737, %p738
      %p740 = pneg %p739
      // Predicated region
      $region93: #{tpu_custom_call.1} parent=5 // pred_check
        _
      $region94: #{tpu_custom_call.1} parent=5 // pred_check_branch
        %742 = sbr.rel (%p739) target = $region96
      $region95: #{tpu_custom_call.1} parent=5 // pred_region
        %s743 = ssub.s32 %s45, 1
        %s744 = sand.u32 %s58, 1
        %s745 = scalar_lea.sflag [#allocation3], %s744
        %s746 = sand.u32 %s58, 1
        %s747 = smul.addr %s746, 4
        %s748 = scalar_lea.vmem [#allocation2], %s747
        // Predicated region
        $region97: #{tpu_custom_call.1} parent=95 // pred_check
          %p749 = pneg %p71
        $region98: #{tpu_custom_call.1} parent=95 // pred_check_branch
          %751 = sbr.rel (%p749) target = $region100
        $region99: #{tpu_custom_call.1} parent=95 // pred_region
          %753 = dma.done %s745, 64
        $region100: #{tpu_custom_call.1} parent=95 // pred_fallthru
          _
        // Predicated region
        $region101: #{tpu_custom_call.1} parent=95 // pred_check
          %p754 = pneg %p165
        $region102: #{tpu_custom_call.1} parent=95 // pred_check_branch
          %756 = sbr.rel (%p754) target = $region104
        $region103: #{tpu_custom_call.1} parent=95 // pred_region
          %758 = dma.done [#allocation6], 512
        $region104: #{tpu_custom_call.1} parent=95 // pred_fallthru
          _
        // Predicated region
        $region105: #{tpu_custom_call.1} parent=95 // pred_check
          %p759 = pneg %p249
        $region106: #{tpu_custom_call.1} parent=95 // pred_check_branch
          %761 = sbr.rel (%p759) target = $region108
        $region107: #{tpu_custom_call.1} parent=95 // pred_region
          %763 = dma.done [#allocation6], 4096
        $region108: #{tpu_custom_call.1} parent=95 // pred_fallthru
          _
        // Predicated region
        $region109: #{tpu_custom_call.1} parent=95 // pred_check
          %p764 = pneg %p312
        $region110: #{tpu_custom_call.1} parent=95 // pred_check_branch
          %766 = sbr.rel (%p764) target = $region112
        $region111: #{tpu_custom_call.1} parent=95 // pred_region
          %768 = dma.done [#allocation9], 32
        $region112: #{tpu_custom_call.1} parent=95 // pred_fallthru
          _
        // Predicated region
        $region113: #{tpu_custom_call.1} parent=95 // pred_check
          %p769 = pneg %p375
        $region114: #{tpu_custom_call.1} parent=95 // pred_check_branch
          %771 = sbr.rel (%p769) target = $region116
        $region115: #{tpu_custom_call.1} parent=95 // pred_region
          %773 = dma.done [#allocation9], 1024
        $region116: #{tpu_custom_call.1} parent=95 // pred_fallthru
          _
        // Predicated region
        $region117: #{tpu_custom_call.1} parent=95 // pred_check
          %p774 = pneg %p417
        $region118: #{tpu_custom_call.1} parent=95 // pred_check_branch
          %776 = sbr.rel (%p774) target = $region120
        $region119: #{tpu_custom_call.1} parent=95 // pred_region
          %778 = dma.done [#allocation12], 4096
        $region120: #{tpu_custom_call.1} parent=95 // pred_fallthru
          _
        // Predicated region
        $region121: #{tpu_custom_call.1} parent=95 // pred_check
          %p779 = pneg %p438
        $region122: #{tpu_custom_call.1} parent=95 // pred_check_branch
          %781 = sbr.rel (%p779) target = $region124
        $region123: #{tpu_custom_call.1} parent=95 // pred_region
          %783 = dma.done [#allocation12], 4096
        $region124: #{tpu_custom_call.1} parent=95 // pred_fallthru
          _
        // Predicated region
        $region125: #{tpu_custom_call.1} parent=95 // pred_check
          %p784 = pneg %p459
        $region126: #{tpu_custom_call.1} parent=95 // pred_check_branch
          %786 = sbr.rel (%p784) target = $region128
        $region127: #{tpu_custom_call.1} parent=95 // pred_region
          %788 = dma.done [#allocation15], 4096
        $region128: #{tpu_custom_call.1} parent=95 // pred_fallthru
          _
        %s789 = sand.u32 %s58, 1
        %s790 = scalar_lea.sflag [#allocation3], %s789
        %s791 = sand.u32 %s58, 1
        %s792 = smul.addr %s791, 4
        %s793 = scalar_lea.vmem [#allocation2], %s792
        %p794 = pneg %p71
        %p795 = pneg %p68
        %p796 = scmp.lt.s32.totalorder %s50, 1
        %s797 = scalar_select %p796, %s50, 1
        %s798 = smul.addr %s797, 8
        %s799 = scalar_lea.vmem %s1, %s798
        %p800 = pneg %p97
        %p801 = pneg %p94
        %p802 = scmp.lt.s32.totalorder %s50, 1
        %s803 = scalar_select %p802, %s50, 1
        %s804 = scalar_lea.vmem %s2, %s803
        %p805 = pneg %p123
        %p806 = pneg %p120
        %p807 = pneg %p144
        %p808 = pneg %p141
        %p809 = pneg %p165
        %p810 = pneg %p162
        %p811 = pneg %p186
        %p812 = pneg %p183
        %p813 = pneg %p207
        %p814 = pneg %p204
        %p815 = pneg %p228
        %p816 = pneg %p225
        %p817 = pneg %p249
        %p818 = pneg %p246
        %p819 = pneg %p270
        %p820 = pneg %p267
        %p821 = pneg %p291
        %p822 = pneg %p288
        %p823 = pneg %p312
        %p824 = pneg %p309
        %p825 = pneg %p333
        %p826 = pneg %p330
        %p827 = pneg %p354
        %p828 = pneg %p351
        %p829 = pneg %p375
        %p830 = pneg %p372
        %p831 = pneg %p396
        %p832 = pneg %p393
        %p833 = pneg %p417
        %p834 = pneg %p414
        %p835 = pneg %p438
        %p836 = pneg %p435
        %p837 = pneg %p459
        %p838 = pneg %p456
        %p839 = pneg %p485
        %p840 = pneg %p482
        %s841 = sand.u32 %s472, 1
        %s842 = scalar_lea.sflag [#allocation4], %s841
        %s843 = sand.u32 %s472, 1
        %s844 = smul.addr %s843, 8
        %s845 = scalar_lea.vmem [#allocation16], %s844
        %p846 = pneg %p511
        %p847 = pneg %p508
        %s848 = sand.u32 %s50, 1
        %s849 = scalar_lea.sflag [#allocation18], %s848
        %s850 = sand.u32 %s498, 1
        %s851 = smul.addr %s850, 8
        %s852 = scalar_lea.vmem [#allocation17], %s851
        %p853 = pneg %p537
        %p854 = pneg %p534
        %s855 = sand.u32 %s50, 1
        %s856 = scalar_lea.sflag [#allocation18], %s855
        %s857 = sand.u32 %s524, 1
        %s858 = smul.addr %s857, 8
        %s859 = scalar_lea.vmem [#allocation19], %s858
        %p860 = pneg %p563
        %p861 = pneg %p560
        %s862 = sand.u32 %s550, 1
        %s863 = scalar_lea.sflag [#allocation21], %s862
        %s864 = sand.u32 %s550, 1
        %s865 = smul.addr %s864, 8
        %s866 = scalar_lea.vmem [#allocation20], %s865
        %p867 = scmp.lt.s32.totalorder %s50, 1
        %s868 = scalar_select %p867, %s50, 1
        %s869 = smul.addr %s868, 8
        %s870 = scalar_lea.vmem %s1, %s869
        %p871 = scmp.lt.s32.totalorder %s50, 1
        %s872 = scalar_select %p871, %s50, 1
        %s873 = scalar_lea.vmem %s2, %s872
        %v875 = vld [vmem:[%s748] sm:$0xf]
        %v876 = vld [vmem:[#allocation5] sm:$0xff]
        %v877 = vld [vmem:[#allocation5 + $0x8] sm:$0xff]
        %v878 = vld [vmem:[#allocation5 + $0x10] sm:$0xff]
        %v879 = vld [vmem:[#allocation5 + $0x18] sm:$0xff]
        %v880 = vld [vmem:[%s5] sm:$0x3]
        %v882 = vperm.slane %v880, 0
        %v883 = vperm.slane %v880, 1
        %v890 = vunpack.c.l.b16 %v876
        %v891 = vunpack.c.h.b16 %v876
        %v892 = vunpack.c.l.b16 %v877
        %v893 = vunpack.c.h.b16 %v877
        %v894 = vunpack.c.l.b16 %v878
        %v895 = vunpack.c.h.b16 %v878
        %v896 = vunpack.c.l.b16 %v879
        %v897 = vunpack.c.h.b16 %v879
        %v898 = vpack.c.b16 %v892, %v890
        %v899 = vpack.c.b16 %v893, %v891
        %v900 = vpack.c.b16 %v896, %v894
        %v901 = vpack.c.b16 %v897, %v895
        %vm906 = vcmask 261120
        %v908 = vsel %vm906, %v875, 0
        %910 = vmatpush.bf16.msra.mxu0 0
        %911 = vmatpush.bf16.msra.mxu0 0
        %912 = vmatpush.bf16.msra.mxu0 0
        %913 = vmatpush.bf16.msra.mxu0 0
        %914 = vmatpush.bf16.msra.mxu0 0
        %915 = vmatpush.bf16.msra.mxu0 0
        %916 = vmatpush.bf16.msra.mxu0 %v900
        %917 = vmatpush.bf16.msra.mxu0 %v898
        %918 = vmatmul.bf16.gmra.mxu0 %v908
        %v919 = vpop.f32.mrf.mxu0
        %v920 = vadd.f32 %v882, %v919
        %v921 = vpop.f32.mrf.mxu0
        %922 = vdwg.mxu0
        %923 = vmatpush.bf16.msra.mxu0 0
        %924 = vmatpush.bf16.msra.mxu0 0
        %925 = vmatpush.bf16.msra.mxu0 0
        %926 = vmatpush.bf16.msra.mxu0 0
        %927 = vmatpush.bf16.msra.mxu0 0
        %928 = vmatpush.bf16.msra.mxu0 0
        %929 = vmatpush.bf16.msra.mxu0 %v901
        %930 = vmatpush.bf16.msra.mxu0 %v899
        %931 = vmatmul.bf16.gmra.mxu0 %v908
        %v932 = vpop.f32.mrf.mxu0
        %v933 = vadd.f32 %v883, %v932
        %v934 = vpop.f32.mrf.mxu0
        %935 = vdwg.mxu0
        %v936 = vld [vmem:[%s6] sm:$0x3]
        %v937 = vld [vmem:[%s7] sm:$0x3]
        %v938 = vadd.f32 %v920, %v933
        %939 = vadd.xlane.f32.xlu0 %v938
        %v940 = vpop.xlane.xlu0 %939
        %v941 = vrcp.pop 256.0
        %v942 = vmul.f32 256.0, %v941
        %v943 = vsub.f32 1.0, %v942
        %v944 = vmul.f32 %v941, %v943
        %v945 = vadd.f32 %v941, %v944
        %vm946 = vweird.f32 %v941
        %v947 = vsel %vm946, %v941, %v945
        %v948 = vmul.f32 %v940, %v947
        %v949 = vsub.f32 %v920, %v948
        %v950 = vsub.f32 %v933, %v948
        %v951 = vmul.f32 %v949, %v949
        %v952 = vmul.f32 %v950, %v950
        %v953 = vadd.f32 %v951, %v952
        %954 = vadd.xlane.f32.xlu0 %v953
        %v955 = vpop.xlane.xlu0 %954
        %v956 = vmul.f32 %v955, %v947
        %v957 = vadd.f32 %v956, 1e-05
        %v958 = vrsqrt.pop %v957
        %v959 = vmul.f32 %v958, %v957
        %v960 = vmul.f32 %v959, %v958
        %v961 = vmul.f32 0.5, %v960
        %v962 = vsub.f32 1.5, %v961
        %v963 = vmul.f32 %v958, %v962
        %vm964 = vweird.f32 %v957
        %vm965 = vweird.f32 %v958
        %vm966 = vmor %vm964, %vm965
        %v967 = vsel %vm966, %v958, %v963
        %v968 = vmul.f32 %v949, %v967
        %v969 = vmul.f32 %v950, %v967
        %v971 = vperm.slane %v936, 0
        %v972 = vperm.slane %v936, 1
        %v975 = vmul.f32 %v968, %v971
        %v976 = vmul.f32 %v969, %v972
        %v978 = vperm.slane %v937, 0
        %v979 = vperm.slane %v937, 1
        %v982 = vadd.f32 %v975, %v978
        %v983 = vadd.f32 %v976, %v979
        %v984 = vmax.f32 %v982, 0.0
        %v985 = vmax.f32 %v983, 0.0
        %v986 = vpack.c.bf16 %v984, %v984
        %v987 = vpack.c.bf16 %v985, %v985
        %v988 = vld [vmem:[#allocation7] sm:$0xff]
        %v989 = vld [vmem:[#allocation7 + $0x8] sm:$0xff]
        %v990 = vld [vmem:[#allocation7 + $0x10] sm:$0xff]
        %v991 = vld [vmem:[#allocation7 + $0x18] sm:$0xff]
        %v992 = vld [vmem:[#allocation7 + $0x20] sm:$0xff]
        %v993 = vld [vmem:[#allocation7 + $0x28] sm:$0xff]
        %v994 = vld [vmem:[#allocation7 + $0x30] sm:$0xff]
        %v995 = vld [vmem:[#allocation7 + $0x38] sm:$0xff]
        %v996 = vld [vmem:[#allocation7 + $0x40] sm:$0xff]
        %v997 = vld [vmem:[#allocation7 + $0x48] sm:$0xff]
        %v998 = vld [vmem:[#allocation7 + $0x50] sm:$0xff]
        %v999 = vld [vmem:[#allocation7 + $0x58] sm:$0xff]
        %v1000 = vld [vmem:[#allocation7 + $0x60] sm:$0xff]
        %v1001 = vld [vmem:[#allocation7 + $0x68] sm:$0xff]
        %v1002 = vld [vmem:[#allocation7 + $0x70] sm:$0xff]
        %v1003 = vld [vmem:[#allocation7 + $0x78] sm:$0xff]
        %v1004 = vld [vmem:[#allocation7 + $0x80] sm:$0xff]
        %v1005 = vld [vmem:[#allocation7 + $0x88] sm:$0xff]
        %v1006 = vld [vmem:[#allocation7 + $0x90] sm:$0xff]
        %v1007 = vld [vmem:[#allocation7 + $0x98] sm:$0xff]
        %v1008 = vld [vmem:[#allocation7 + $0xa0] sm:$0xff]
        %v1009 = vld [vmem:[#allocation7 + $0xa8] sm:$0xff]
        %v1010 = vld [vmem:[#allocation7 + $0xb0] sm:$0xff]
        %v1011 = vld [vmem:[#allocation7 + $0xb8] sm:$0xff]
        %v1012 = vld [vmem:[#allocation7 + $0xc0] sm:$0xff]
        %v1013 = vld [vmem:[#allocation7 + $0xc8] sm:$0xff]
        %v1014 = vld [vmem:[#allocation7 + $0xd0] sm:$0xff]
        %v1015 = vld [vmem:[#allocation7 + $0xd8] sm:$0xff]
        %v1016 = vld [vmem:[#allocation7 + $0xe0] sm:$0xff]
        %v1017 = vld [vmem:[#allocation7 + $0xe8] sm:$0xff]
        %v1018 = vld [vmem:[#allocation7 + $0xf0] sm:$0xff]
        %v1019 = vld [vmem:[#allocation7 + $0xf8] sm:$0xff]
        %v1020 = vld [vmem:[%s9] sm:$0x3]
        %v1022 = vperm.slane %v1020, 0
        %v1023 = vperm.slane %v1020, 1
        %v1058 = vunpack.c.l.b16 %v988
        %v1059 = vunpack.c.h.b16 %v988
        %v1060 = vunpack.c.l.b16 %v989
        %v1061 = vunpack.c.h.b16 %v989
        %v1062 = vunpack.c.l.b16 %v990
        %v1063 = vunpack.c.h.b16 %v990
        %v1064 = vunpack.c.l.b16 %v991
        %v1065 = vunpack.c.h.b16 %v991
        %v1066 = vunpack.c.l.b16 %v992
        %v1067 = vunpack.c.h.b16 %v992
        %v1068 = vunpack.c.l.b16 %v993
        %v1069 = vunpack.c.h.b16 %v993
        %v1070 = vunpack.c.l.b16 %v994
        %v1071 = vunpack.c.h.b16 %v994
        %v1072 = vunpack.c.l.b16 %v995
        %v1073 = vunpack.c.h.b16 %v995
        %v1074 = vunpack.c.l.b16 %v996
        %v1075 = vunpack.c.h.b16 %v996
        %v1076 = vunpack.c.l.b16 %v997
        %v1077 = vunpack.c.h.b16 %v997
        %v1078 = vunpack.c.l.b16 %v998
        %v1079 = vunpack.c.h.b16 %v998
        %v1080 = vunpack.c.l.b16 %v999
        %v1081 = vunpack.c.h.b16 %v999
        %v1082 = vunpack.c.l.b16 %v1000
        %v1083 = vunpack.c.h.b16 %v1000
        %v1084 = vunpack.c.l.b16 %v1001
        %v1085 = vunpack.c.h.b16 %v1001
        %v1086 = vunpack.c.l.b16 %v1002
        %v1087 = vunpack.c.h.b16 %v1002
        %v1088 = vunpack.c.l.b16 %v1003
        %v1089 = vunpack.c.h.b16 %v1003
        %v1090 = vunpack.c.l.b16 %v1004
        %v1091 = vunpack.c.h.b16 %v1004
        %v1092 = vunpack.c.l.b16 %v1005
        %v1093 = vunpack.c.h.b16 %v1005
        %v1094 = vunpack.c.l.b16 %v1006
        %v1095 = vunpack.c.h.b16 %v1006
        %v1096 = vunpack.c.l.b16 %v1007
        %v1097 = vunpack.c.h.b16 %v1007
        %v1098 = vunpack.c.l.b16 %v1008
        %v1099 = vunpack.c.h.b16 %v1008
        %v1100 = vunpack.c.l.b16 %v1009
        %v1101 = vunpack.c.h.b16 %v1009
        %v1102 = vunpack.c.l.b16 %v1010
        %v1103 = vunpack.c.h.b16 %v1010
        %v1104 = vunpack.c.l.b16 %v1011
        %v1105 = vunpack.c.h.b16 %v1011
        %v1106 = vunpack.c.l.b16 %v1012
        %v1107 = vunpack.c.h.b16 %v1012
        %v1108 = vunpack.c.l.b16 %v1013
        %v1109 = vunpack.c.h.b16 %v1013
        %v1110 = vunpack.c.l.b16 %v1014
        %v1111 = vunpack.c.h.b16 %v1014
        %v1112 = vunpack.c.l.b16 %v1015
        %v1113 = vunpack.c.h.b16 %v1015
        %v1114 = vunpack.c.l.b16 %v1016
        %v1115 = vunpack.c.h.b16 %v1016
        %v1116 = vunpack.c.l.b16 %v1017
        %v1117 = vunpack.c.h.b16 %v1017
        %v1118 = vunpack.c.l.b16 %v1018
        %v1119 = vunpack.c.h.b16 %v1018
        %v1120 = vunpack.c.l.b16 %v1019
        %v1121 = vunpack.c.h.b16 %v1019
        %v1122 = vpack.c.b16 %v1060, %v1058
        %v1123 = vpack.c.b16 %v1061, %v1059
        %v1124 = vpack.c.b16 %v1064, %v1062
        %v1125 = vpack.c.b16 %v1065, %v1063
        %v1126 = vpack.c.b16 %v1068, %v1066
        %v1127 = vpack.c.b16 %v1069, %v1067
        %v1128 = vpack.c.b16 %v1072, %v1070
        %v1129 = vpack.c.b16 %v1073, %v1071
        %v1130 = vpack.c.b16 %v1076, %v1074
        %v1131 = vpack.c.b16 %v1077, %v1075
        %v1132 = vpack.c.b16 %v1080, %v1078
        %v1133 = vpack.c.b16 %v1081, %v1079
        %v1134 = vpack.c.b16 %v1084, %v1082
        %v1135 = vpack.c.b16 %v1085, %v1083
        %v1136 = vpack.c.b16 %v1088, %v1086
        %v1137 = vpack.c.b16 %v1089, %v1087
        %v1138 = vpack.c.b16 %v1092, %v1090
        %v1139 = vpack.c.b16 %v1093, %v1091
        %v1140 = vpack.c.b16 %v1096, %v1094
        %v1141 = vpack.c.b16 %v1097, %v1095
        %v1142 = vpack.c.b16 %v1100, %v1098
        %v1143 = vpack.c.b16 %v1101, %v1099
        %v1144 = vpack.c.b16 %v1104, %v1102
        %v1145 = vpack.c.b16 %v1105, %v1103
        %v1146 = vpack.c.b16 %v1108, %v1106
        %v1147 = vpack.c.b16 %v1109, %v1107
        %v1148 = vpack.c.b16 %v1112, %v1110
        %v1149 = vpack.c.b16 %v1113, %v1111
        %v1150 = vpack.c.b16 %v1116, %v1114
        %v1151 = vpack.c.b16 %v1117, %v1115
        %v1152 = vpack.c.b16 %v1120, %v1118
        %v1153 = vpack.c.b16 %v1121, %v1119
        %1186 = vmatpush.bf16.msra.mxu0 %v1136
        %1187 = vmatpush.bf16.msra.mxu0 %v1134
        %1188 = vmatpush.bf16.msra.mxu0 %v1132
        %1189 = vmatpush.bf16.msra.mxu0 %v1130
        %1190 = vmatpush.bf16.msra.mxu0 %v1128
        %1191 = vmatpush.bf16.msra.mxu0 %v1126
        %1192 = vmatpush.bf16.msra.mxu0 %v1124
        %1193 = vmatpush.bf16.msra.mxu0 %v1122
        %1194 = vmatmul.bf16.gmra.mxu0 %v986
        %v1195 = vpop.f32.mrf.mxu0
        %v1196 = vadd.f32 %v1022, %v1195
        %v1197 = vpop.f32.mrf.mxu0
        %1198 = vdwg.mxu0
        %1199 = vmatpush.bf16.msra.mxu0 %v1152
        %1200 = vmatpush.bf16.msra.mxu0 %v1150
        %1201 = vmatpush.bf16.msra.mxu0 %v1148
        %1202 = vmatpush.bf16.msra.mxu0 %v1146
        %1203 = vmatpush.bf16.msra.mxu0 %v1144
        %1204 = vmatpush.bf16.msra.mxu0 %v1142
        %1205 = vmatpush.bf16.msra.mxu0 %v1140
        %1206 = vmatpush.bf16.msra.mxu0 %v1138
        %1207 = vmatmul.bf16.gmra.mxu0 %v987
        %v1208 = vpop.f32.mrf.mxu0
        %v1209 = vadd.f32 %v1196, %v1208
        %v1210 = vpop.f32.mrf.mxu0
        %1211 = vdwg.mxu0
        %1212 = vmatpush.bf16.msra.mxu0 %v1137
        %1213 = vmatpush.bf16.msra.mxu0 %v1135
        %1214 = vmatpush.bf16.msra.mxu0 %v1133
        %1215 = vmatpush.bf16.msra.mxu0 %v1131
        %1216 = vmatpush.bf16.msra.mxu0 %v1129
        %1217 = vmatpush.bf16.msra.mxu0 %v1127
        %1218 = vmatpush.bf16.msra.mxu0 %v1125
        %1219 = vmatpush.bf16.msra.mxu0 %v1123
        %1220 = vmatmul.bf16.gmra.mxu0 %v986
        %v1221 = vpop.f32.mrf.mxu0
        %v1222 = vadd.f32 %v1023, %v1221
        %v1223 = vpop.f32.mrf.mxu0
        %1224 = vdwg.mxu0
        %1225 = vmatpush.bf16.msra.mxu0 %v1153
        %1226 = vmatpush.bf16.msra.mxu0 %v1151
        %1227 = vmatpush.bf16.msra.mxu0 %v1149
        %1228 = vmatpush.bf16.msra.mxu0 %v1147
        %1229 = vmatpush.bf16.msra.mxu0 %v1145
        %1230 = vmatpush.bf16.msra.mxu0 %v1143
        %1231 = vmatpush.bf16.msra.mxu0 %v1141
        %1232 = vmatpush.bf16.msra.mxu0 %v1139
        %1233 = vmatmul.bf16.gmra.mxu0 %v987
        %v1234 = vpop.f32.mrf.mxu0
        %v1235 = vadd.f32 %v1222, %v1234
        %v1236 = vpop.f32.mrf.mxu0
        %1237 = vdwg.mxu0
        %v1238 = vld [vmem:[%s10] sm:$0x3]
        %v1239 = vld [vmem:[#allocation8] sm:$0x3]
        %v1240 = vadd.f32 %v1209, %v1235
        %1241 = vadd.xlane.f32.xlu0 %v1240
        %v1242 = vpop.xlane.xlu0 %1241
        %v1243 = vmul.f32 %v1242, %v947
        %v1244 = vsub.f32 %v1209, %v1243
        %v1245 = vsub.f32 %v1235, %v1243
        %v1246 = vmul.f32 %v1244, %v1244
        %v1247 = vmul.f32 %v1245, %v1245
        %v1248 = vadd.f32 %v1246, %v1247
        %1249 = vadd.xlane.f32.xlu0 %v1248
        %v1250 = vpop.xlane.xlu0 %1249
        %v1251 = vmul.f32 %v1250, %v947
        %v1252 = vadd.f32 %v1251, 1e-05
        %v1253 = vrsqrt.pop %v1252
        %v1254 = vmul.f32 %v1253, %v1252
        %v1255 = vmul.f32 %v1254, %v1253
        %v1256 = vmul.f32 0.5, %v1255
        %v1257 = vsub.f32 1.5, %v1256
        %v1258 = vmul.f32 %v1253, %v1257
        %vm1259 = vweird.f32 %v1252
        %vm1260 = vweird.f32 %v1253
        %vm1261 = vmor %vm1259, %vm1260
        %v1262 = vsel %vm1261, %v1253, %v1258
        %v1263 = vmul.f32 %v1244, %v1262
        %v1264 = vmul.f32 %v1245, %v1262
        %v1266 = vperm.slane %v1238, 0
        %v1267 = vperm.slane %v1238, 1
        %v1270 = vmul.f32 %v1263, %v1266
        %v1271 = vmul.f32 %v1264, %v1267
        %v1273 = vperm.slane %v1239, 0
        %v1274 = vperm.slane %v1239, 1
        %v1277 = vadd.f32 %v1270, %v1273
        %v1278 = vadd.f32 %v1271, %v1274
        %v1279 = vmax.f32 %v1277, 0.0
        %v1280 = vmax.f32 %v1278, 0.0
        %v1281 = vld [vmem:[%s870] sm:$0xff]
        %v1282 = vld [vmem:[%s12] sm:$0x1]
        %1284 = vset.pattern.permute.xlu0 0
        %1285 = vperm.xlu0 %1284, %v1281
        %v1286 = vpop.permute.xlu0 %1285
        %v1289 = vperm.slane %v1282, 0
        %v1291 = vmul.f32 %v1286, %v1289
        %v1292 = vld [vmem:[%s13] sm:$0x1]
        %v1294 = vperm.slane %v1292, 0
        %v1296 = vadd.f32 %v1291, %v1294
        %v1297 = vmul.f32 %v1296, %v1296
        %v1298 = vtanh.pop %v1297
        %v1299 = vsub.f32 1.0, %v1298
        %v1300 = vpack.c.bf16 %v1299, %v1299
        %v1301 = vld [vmem:[#allocation10] sm:$0xff]
        %v1302 = vld [vmem:[#allocation10 + $0x8] sm:$0xff]
        %v1303 = vld [vmem:[#allocation10 + $0x10] sm:$0xff]
        %v1304 = vld [vmem:[#allocation10 + $0x18] sm:$0xff]
        %v1305 = vld [vmem:[#allocation10 + $0x20] sm:$0xff]
        %v1306 = vld [vmem:[#allocation10 + $0x28] sm:$0xff]
        %v1307 = vld [vmem:[#allocation10 + $0x30] sm:$0xff]
        %v1308 = vld [vmem:[#allocation10 + $0x38] sm:$0xff]
        %v1309 = vld [vmem:[%s15] sm:$0x3]
        %v1311 = vperm.slane %v1309, 0
        %v1312 = vperm.slane %v1309, 1
        %v1323 = vunpack.c.l.b16 %v1301
        %v1324 = vunpack.c.h.b16 %v1301
        %v1325 = vunpack.c.l.b16 %v1302
        %v1326 = vunpack.c.h.b16 %v1302
        %v1327 = vunpack.c.l.b16 %v1303
        %v1328 = vunpack.c.h.b16 %v1303
        %v1329 = vunpack.c.l.b16 %v1304
        %v1330 = vunpack.c.h.b16 %v1304
        %v1331 = vunpack.c.l.b16 %v1305
        %v1332 = vunpack.c.h.b16 %v1305
        %v1333 = vunpack.c.l.b16 %v1306
        %v1334 = vunpack.c.h.b16 %v1306
        %v1335 = vunpack.c.l.b16 %v1307
        %v1336 = vunpack.c.h.b16 %v1307
        %v1337 = vunpack.c.l.b16 %v1308
        %v1338 = vunpack.c.h.b16 %v1308
        %v1339 = vpack.c.b16 %v1325, %v1323
        %v1340 = vpack.c.b16 %v1326, %v1324
        %v1341 = vpack.c.b16 %v1329, %v1327
        %v1342 = vpack.c.b16 %v1330, %v1328
        %v1343 = vpack.c.b16 %v1333, %v1331
        %v1344 = vpack.c.b16 %v1334, %v1332
        %v1345 = vpack.c.b16 %v1337, %v1335
        %v1346 = vpack.c.b16 %v1338, %v1336
        %vm1355 = vcmask 523264
        %v1357 = vsel %vm1355, %v1300, 0
        %1359 = vmatpush.bf16.msra.mxu0 0
        %1360 = vmatpush.bf16.msra.mxu0 0
        %1361 = vmatpush.bf16.msra.mxu0 0
        %1362 = vmatpush.bf16.msra.mxu0 0
        %1363 = vmatpush.bf16.msra.mxu0 %v1345
        %1364 = vmatpush.bf16.msra.mxu0 %v1343
        %1365 = vmatpush.bf16.msra.mxu0 %v1341
        %1366 = vmatpush.bf16.msra.mxu0 %v1339
        %1367 = vmatmul.bf16.gmra.mxu0 %v1357
        %v1368 = vpop.f32.mrf.mxu0
        %v1369 = vadd.f32 %v1311, %v1368
        %v1370 = vpop.f32.mrf.mxu0
        %1371 = vdwg.mxu0
        %1372 = vmatpush.bf16.msra.mxu0 0
        %1373 = vmatpush.bf16.msra.mxu0 0
        %1374 = vmatpush.bf16.msra.mxu0 0
        %1375 = vmatpush.bf16.msra.mxu0 0
        %1376 = vmatpush.bf16.msra.mxu0 %v1346
        %1377 = vmatpush.bf16.msra.mxu0 %v1344
        %1378 = vmatpush.bf16.msra.mxu0 %v1342
        %1379 = vmatpush.bf16.msra.mxu0 %v1340
        %1380 = vmatmul.bf16.gmra.mxu0 %v1357
        %v1381 = vpop.f32.mrf.mxu0
        %v1382 = vadd.f32 %v1312, %v1381
        %v1383 = vpop.f32.mrf.mxu0
        %1384 = vdwg.mxu0
        %v1385 = vlaneseq
        %v1386 = vand.u32 %v1385, 127
        %v1387 = vcvt.s32.f32 %v1386
        %v1388 = vld [vmem:[%s873] sm:$0x1]
        %1390 = vset.pattern.permute.xlu0 0
        %1391 = vperm.xlu0 %1390, %v1388
        %v1392 = vpop.permute.xlu0 %1391
        %v1394 = vperm.slane %v1392, 0
        %vm1395 = vcmp.lt.f32.partialorder %v1387, %v1394
        %v1396 = vsel %vm1395, 1, 0
        %v1397 = vcvt.s32.f32 %v1396
        %v1398 = vld [vmem:[%s3] sm:$0xff]
        %v1399 = vld [vmem:[%s3 + $0x8] sm:$0xff]
        %v1400 = vlaneseq
        %v1401 = vshrl.u32 %v1400, 7
        %1403 = vset.pattern.permute.xlu0 %v1401
        %1404 = vperm.xlu0 %1403, %v1397
        %v1405 = vpop.permute.xlu0 %1404
        %v1406 = vmul.f32 %v1398, %v1405
        %v1407 = vmul.f32 %v1399, %v1405
        %v1408 = vadd.f32 %v1279, %v1369
        %v1409 = vadd.f32 %v1280, %v1382
        %v1410 = vadd.f32 %v1408, %v1406
        %v1411 = vadd.f32 %v1409, %v1407
        %v1412 = vpack.c.bf16 %v1411, %v1410
        %1413 = vst [vmem:[%s845] sm:$0xff] %v1412
        %v1414 = vpack.c.bf16 %v1410, %v1410
        %v1415 = vpack.c.bf16 %v1411, %v1411
        %v1416 = vld [vmem:[#allocation11] sm:$0xff]
        %v1417 = vld [vmem:[#allocation11 + $0x8] sm:$0xff]
        %v1418 = vld [vmem:[#allocation11 + $0x10] sm:$0xff]
        %v1419 = vld [vmem:[#allocation11 + $0x18] sm:$0xff]
        %v1420 = vld [vmem:[#allocation11 + $0x20] sm:$0xff]
        %v1421 = vld [vmem:[#allocation11 + $0x28] sm:$0xff]
        %v1422 = vld [vmem:[#allocation11 + $0x30] sm:$0xff]
        %v1423 = vld [vmem:[#allocation11 + $0x38] sm:$0xff]
        %v1424 = vld [vmem:[#allocation11 + $0x40] sm:$0xff]
        %v1425 = vld [vmem:[#allocation11 + $0x48] sm:$0xff]
        %v1426 = vld [vmem:[#allocation11 + $0x50] sm:$0xff]
        %v1427 = vld [vmem:[#allocation11 + $0x58] sm:$0xff]
        %v1428 = vld [vmem:[#allocation11 + $0x60] sm:$0xff]
        %v1429 = vld [vmem:[#allocation11 + $0x68] sm:$0xff]
        %v1430 = vld [vmem:[#allocation11 + $0x70] sm:$0xff]
        %v1431 = vld [vmem:[#allocation11 + $0x78] sm:$0xff]
        %v1432 = vld [vmem:[#allocation11 + $0x80] sm:$0xff]
        %v1433 = vld [vmem:[#allocation11 + $0x88] sm:$0xff]
        %v1434 = vld [vmem:[#allocation11 + $0x90] sm:$0xff]
        %v1435 = vld [vmem:[#allocation11 + $0x98] sm:$0xff]
        %v1436 = vld [vmem:[#allocation11 + $0xa0] sm:$0xff]
        %v1437 = vld [vmem:[#allocation11 + $0xa8] sm:$0xff]
        %v1438 = vld [vmem:[#allocation11 + $0xb0] sm:$0xff]
        %v1439 = vld [vmem:[#allocation11 + $0xb8] sm:$0xff]
        %v1440 = vld [vmem:[#allocation11 + $0xc0] sm:$0xff]
        %v1441 = vld [vmem:[#allocation11 + $0xc8] sm:$0xff]
        %v1442 = vld [vmem:[#allocation11 + $0xd0] sm:$0xff]
        %v1443 = vld [vmem:[#allocation11 + $0xd8] sm:$0xff]
        %v1444 = vld [vmem:[#allocation11 + $0xe0] sm:$0xff]
        %v1445 = vld [vmem:[#allocation11 + $0xe8] sm:$0xff]
        %v1446 = vld [vmem:[#allocation11 + $0xf0] sm:$0xff]
        %v1447 = vld [vmem:[#allocation11 + $0xf8] sm:$0xff]
        %v1480 = vunpack.c.l.b16 %v1416
        %v1481 = vunpack.c.h.b16 %v1416
        %v1482 = vunpack.c.l.b16 %v1417
        %v1483 = vunpack.c.h.b16 %v1417
        %v1484 = vunpack.c.l.b16 %v1418
        %v1485 = vunpack.c.h.b16 %v1418
        %v1486 = vunpack.c.l.b16 %v1419
        %v1487 = vunpack.c.h.b16 %v1419
        %v1488 = vunpack.c.l.b16 %v1420
        %v1489 = vunpack.c.h.b16 %v1420
        %v1490 = vunpack.c.l.b16 %v1421
        %v1491 = vunpack.c.h.b16 %v1421
        %v1492 = vunpack.c.l.b16 %v1422
        %v1493 = vunpack.c.h.b16 %v1422
        %v1494 = vunpack.c.l.b16 %v1423
        %v1495 = vunpack.c.h.b16 %v1423
        %v1496 = vunpack.c.l.b16 %v1424
        %v1497 = vunpack.c.h.b16 %v1424
        %v1498 = vunpack.c.l.b16 %v1425
        %v1499 = vunpack.c.h.b16 %v1425
        %v1500 = vunpack.c.l.b16 %v1426
        %v1501 = vunpack.c.h.b16 %v1426
        %v1502 = vunpack.c.l.b16 %v1427
        %v1503 = vunpack.c.h.b16 %v1427
        %v1504 = vunpack.c.l.b16 %v1428
        %v1505 = vunpack.c.h.b16 %v1428
        %v1506 = vunpack.c.l.b16 %v1429
        %v1507 = vunpack.c.h.b16 %v1429
        %v1508 = vunpack.c.l.b16 %v1430
        %v1509 = vunpack.c.h.b16 %v1430
        %v1510 = vunpack.c.l.b16 %v1431
        %v1511 = vunpack.c.h.b16 %v1431
        %v1512 = vunpack.c.l.b16 %v1432
        %v1513 = vunpack.c.h.b16 %v1432
        %v1514 = vunpack.c.l.b16 %v1433
        %v1515 = vunpack.c.h.b16 %v1433
        %v1516 = vunpack.c.l.b16 %v1434
        %v1517 = vunpack.c.h.b16 %v1434
        %v1518 = vunpack.c.l.b16 %v1435
        %v1519 = vunpack.c.h.b16 %v1435
        %v1520 = vunpack.c.l.b16 %v1436
        %v1521 = vunpack.c.h.b16 %v1436
        %v1522 = vunpack.c.l.b16 %v1437
        %v1523 = vunpack.c.h.b16 %v1437
        %v1524 = vunpack.c.l.b16 %v1438
        %v1525 = vunpack.c.h.b16 %v1438
        %v1526 = vunpack.c.l.b16 %v1439
        %v1527 = vunpack.c.h.b16 %v1439
        %v1528 = vunpack.c.l.b16 %v1440
        %v1529 = vunpack.c.h.b16 %v1440
        %v1530 = vunpack.c.l.b16 %v1441
        %v1531 = vunpack.c.h.b16 %v1441
        %v1532 = vunpack.c.l.b16 %v1442
        %v1533 = vunpack.c.h.b16 %v1442
        %v1534 = vunpack.c.l.b16 %v1443
        %v1535 = vunpack.c.h.b16 %v1443
        %v1536 = vunpack.c.l.b16 %v1444
        %v1537 = vunpack.c.h.b16 %v1444
        %v1538 = vunpack.c.l.b16 %v1445
        %v1539 = vunpack.c.h.b16 %v1445
        %v1540 = vunpack.c.l.b16 %v1446
        %v1541 = vunpack.c.h.b16 %v1446
        %v1542 = vunpack.c.l.b16 %v1447
        %v1543 = vunpack.c.h.b16 %v1447
        %v1544 = vpack.c.b16 %v1482, %v1480
        %v1545 = vpack.c.b16 %v1483, %v1481
        %v1546 = vpack.c.b16 %v1486, %v1484
        %v1547 = vpack.c.b16 %v1487, %v1485
        %v1548 = vpack.c.b16 %v1490, %v1488
        %v1549 = vpack.c.b16 %v1491, %v1489
        %v1550 = vpack.c.b16 %v1494, %v1492
        %v1551 = vpack.c.b16 %v1495, %v1493
        %v1552 = vpack.c.b16 %v1498, %v1496
        %v1553 = vpack.c.b16 %v1499, %v1497
        %v1554 = vpack.c.b16 %v1502, %v1500
        %v1555 = vpack.c.b16 %v1503, %v1501
        %v1556 = vpack.c.b16 %v1506, %v1504
        %v1557 = vpack.c.b16 %v1507, %v1505
        %v1558 = vpack.c.b16 %v1510, %v1508
        %v1559 = vpack.c.b16 %v1511, %v1509
        %v1560 = vpack.c.b16 %v1514, %v1512
        %v1561 = vpack.c.b16 %v1515, %v1513
        %v1562 = vpack.c.b16 %v1518, %v1516
        %v1563 = vpack.c.b16 %v1519, %v1517
        %v1564 = vpack.c.b16 %v1522, %v1520
        %v1565 = vpack.c.b16 %v1523, %v1521
        %v1566 = vpack.c.b16 %v1526, %v1524
        %v1567 = vpack.c.b16 %v1527, %v1525
        %v1568 = vpack.c.b16 %v1530, %v1528
        %v1569 = vpack.c.b16 %v1531, %v1529
        %v1570 = vpack.c.b16 %v1534, %v1532
        %v1571 = vpack.c.b16 %v1535, %v1533
        %v1572 = vpack.c.b16 %v1538, %v1536
        %v1573 = vpack.c.b16 %v1539, %v1537
        %v1574 = vpack.c.b16 %v1542, %v1540
        %v1575 = vpack.c.b16 %v1543, %v1541
        %1608 = vmatpush.bf16.msra.mxu0 %v1558
        %1609 = vmatpush.bf16.msra.mxu0 %v1556
        %1610 = vmatpush.bf16.msra.mxu0 %v1554
        %1611 = vmatpush.bf16.msra.mxu0 %v1552
        %1612 = vmatpush.bf16.msra.mxu0 %v1550
        %1613 = vmatpush.bf16.msra.mxu0 %v1548
        %1614 = vmatpush.bf16.msra.mxu0 %v1546
        %1615 = vmatpush.bf16.msra.mxu0 %v1544
        %1616 = vmatmul.bf16.gmra.mxu0 %v1414
        %v1617 = vpop.f32.mrf.mxu0
        %v1618 = vadd.f32 0.0, %v1617
        %v1619 = vpop.f32.mrf.mxu0
        %1620 = vdwg.mxu0
        %1621 = vmatpush.bf16.msra.mxu0 %v1574
        %1622 = vmatpush.bf16.msra.mxu0 %v1572
        %1623 = vmatpush.bf16.msra.mxu0 %v1570
        %1624 = vmatpush.bf16.msra.mxu0 %v1568
        %1625 = vmatpush.bf16.msra.mxu0 %v1566
        %1626 = vmatpush.bf16.msra.mxu0 %v1564
        %1627 = vmatpush.bf16.msra.mxu0 %v1562
        %1628 = vmatpush.bf16.msra.mxu0 %v1560
        %1629 = vmatmul.bf16.gmra.mxu0 %v1415
        %v1630 = vpop.f32.mrf.mxu0
        %v1631 = vadd.f32 %v1618, %v1630
        %v1632 = vpop.f32.mrf.mxu0
        %1633 = vdwg.mxu0
        %1634 = vmatpush.bf16.msra.mxu0 %v1559
        %1635 = vmatpush.bf16.msra.mxu0 %v1557
        %1636 = vmatpush.bf16.msra.mxu0 %v1555
        %1637 = vmatpush.bf16.msra.mxu0 %v1553
        %1638 = vmatpush.bf16.msra.mxu0 %v1551
        %1639 = vmatpush.bf16.msra.mxu0 %v1549
        %1640 = vmatpush.bf16.msra.mxu0 %v1547
        %1641 = vmatpush.bf16.msra.mxu0 %v1545
        %1642 = vmatmul.bf16.gmra.mxu0 %v1414
        %v1643 = vpop.f32.mrf.mxu0
        %v1644 = vadd.f32 0.0, %v1643
        %v1645 = vpop.f32.mrf.mxu0
        %1646 = vdwg.mxu0
        %1647 = vmatpush.bf16.msra.mxu0 %v1575
        %1648 = vmatpush.bf16.msra.mxu0 %v1573
        %1649 = vmatpush.bf16.msra.mxu0 %v1571
        %1650 = vmatpush.bf16.msra.mxu0 %v1569
        %1651 = vmatpush.bf16.msra.mxu0 %v1567
        %1652 = vmatpush.bf16.msra.mxu0 %v1565
        %1653 = vmatpush.bf16.msra.mxu0 %v1563
        %1654 = vmatpush.bf16.msra.mxu0 %v1561
        %1655 = vmatmul.bf16.gmra.mxu0 %v1415
        %v1656 = vpop.f32.mrf.mxu0
        %v1657 = vadd.f32 %v1644, %v1656
        %v1658 = vpop.f32.mrf.mxu0
        %1659 = vdwg.mxu0
        %v1660 = vpack.c.bf16 %v1657, %v1631
        %1661 = vst [vmem:[%s852] sm:$0xff] %v1660
        %v1662 = vld [vmem:[#allocation13] sm:$0xff]
        %v1663 = vld [vmem:[#allocation13 + $0x8] sm:$0xff]
        %v1664 = vld [vmem:[#allocation13 + $0x10] sm:$0xff]
        %v1665 = vld [vmem:[#allocation13 + $0x18] sm:$0xff]
        %v1666 = vld [vmem:[#allocation13 + $0x20] sm:$0xff]
        %v1667 = vld [vmem:[#allocation13 + $0x28] sm:$0xff]
        %v1668 = vld [vmem:[#allocation13 + $0x30] sm:$0xff]
        %v1669 = vld [vmem:[#allocation13 + $0x38] sm:$0xff]
        %v1670 = vld [vmem:[#allocation13 + $0x40] sm:$0xff]
        %v1671 = vld [vmem:[#allocation13 + $0x48] sm:$0xff]
        %v1672 = vld [vmem:[#allocation13 + $0x50] sm:$0xff]
        %v1673 = vld [vmem:[#allocation13 + $0x58] sm:$0xff]
        %v1674 = vld [vmem:[#allocation13 + $0x60] sm:$0xff]
        %v1675 = vld [vmem:[#allocation13 + $0x68] sm:$0xff]
        %v1676 = vld [vmem:[#allocation13 + $0x70] sm:$0xff]
        %v1677 = vld [vmem:[#allocation13 + $0x78] sm:$0xff]
        %v1678 = vld [vmem:[#allocation13 + $0x80] sm:$0xff]
        %v1679 = vld [vmem:[#allocation13 + $0x88] sm:$0xff]
        %v1680 = vld [vmem:[#allocation13 + $0x90] sm:$0xff]
        %v1681 = vld [vmem:[#allocation13 + $0x98] sm:$0xff]
        %v1682 = vld [vmem:[#allocation13 + $0xa0] sm:$0xff]
        %v1683 = vld [vmem:[#allocation13 + $0xa8] sm:$0xff]
        %v1684 = vld [vmem:[#allocation13 + $0xb0] sm:$0xff]
        %v1685 = vld [vmem:[#allocation13 + $0xb8] sm:$0xff]
        %v1686 = vld [vmem:[#allocation13 + $0xc0] sm:$0xff]
        %v1687 = vld [vmem:[#allocation13 + $0xc8] sm:$0xff]
        %v1688 = vld [vmem:[#allocation13 + $0xd0] sm:$0xff]
        %v1689 = vld [vmem:[#allocation13 + $0xd8] sm:$0xff]
        %v1690 = vld [vmem:[#allocation13 + $0xe0] sm:$0xff]
        %v1691 = vld [vmem:[#allocation13 + $0xe8] sm:$0xff]
        %v1692 = vld [vmem:[#allocation13 + $0xf0] sm:$0xff]
        %v1693 = vld [vmem:[#allocation13 + $0xf8] sm:$0xff]
        %v1726 = vunpack.c.l.b16 %v1662
        %v1727 = vunpack.c.h.b16 %v1662
        %v1728 = vunpack.c.l.b16 %v1663
        %v1729 = vunpack.c.h.b16 %v1663
        %v1730 = vunpack.c.l.b16 %v1664
        %v1731 = vunpack.c.h.b16 %v1664
        %v1732 = vunpack.c.l.b16 %v1665
        %v1733 = vunpack.c.h.b16 %v1665
        %v1734 = vunpack.c.l.b16 %v1666
        %v1735 = vunpack.c.h.b16 %v1666
        %v1736 = vunpack.c.l.b16 %v1667
        %v1737 = vunpack.c.h.b16 %v1667
        %v1738 = vunpack.c.l.b16 %v1668
        %v1739 = vunpack.c.h.b16 %v1668
        %v1740 = vunpack.c.l.b16 %v1669
        %v1741 = vunpack.c.h.b16 %v1669
        %v1742 = vunpack.c.l.b16 %v1670
        %v1743 = vunpack.c.h.b16 %v1670
        %v1744 = vunpack.c.l.b16 %v1671
        %v1745 = vunpack.c.h.b16 %v1671
        %v1746 = vunpack.c.l.b16 %v1672
        %v1747 = vunpack.c.h.b16 %v1672
        %v1748 = vunpack.c.l.b16 %v1673
        %v1749 = vunpack.c.h.b16 %v1673
        %v1750 = vunpack.c.l.b16 %v1674
        %v1751 = vunpack.c.h.b16 %v1674
        %v1752 = vunpack.c.l.b16 %v1675
        %v1753 = vunpack.c.h.b16 %v1675
        %v1754 = vunpack.c.l.b16 %v1676
        %v1755 = vunpack.c.h.b16 %v1676
        %v1756 = vunpack.c.l.b16 %v1677
        %v1757 = vunpack.c.h.b16 %v1677
        %v1758 = vunpack.c.l.b16 %v1678
        %v1759 = vunpack.c.h.b16 %v1678
        %v1760 = vunpack.c.l.b16 %v1679
        %v1761 = vunpack.c.h.b16 %v1679
        %v1762 = vunpack.c.l.b16 %v1680
        %v1763 = vunpack.c.h.b16 %v1680
        %v1764 = vunpack.c.l.b16 %v1681
        %v1765 = vunpack.c.h.b16 %v1681
        %v1766 = vunpack.c.l.b16 %v1682
        %v1767 = vunpack.c.h.b16 %v1682
        %v1768 = vunpack.c.l.b16 %v1683
        %v1769 = vunpack.c.h.b16 %v1683
        %v1770 = vunpack.c.l.b16 %v1684
        %v1771 = vunpack.c.h.b16 %v1684
        %v1772 = vunpack.c.l.b16 %v1685
        %v1773 = vunpack.c.h.b16 %v1685
        %v1774 = vunpack.c.l.b16 %v1686
        %v1775 = vunpack.c.h.b16 %v1686
        %v1776 = vunpack.c.l.b16 %v1687
        %v1777 = vunpack.c.h.b16 %v1687
        %v1778 = vunpack.c.l.b16 %v1688
        %v1779 = vunpack.c.h.b16 %v1688
        %v1780 = vunpack.c.l.b16 %v1689
        %v1781 = vunpack.c.h.b16 %v1689
        %v1782 = vunpack.c.l.b16 %v1690
        %v1783 = vunpack.c.h.b16 %v1690
        %v1784 = vunpack.c.l.b16 %v1691
        %v1785 = vunpack.c.h.b16 %v1691
        %v1786 = vunpack.c.l.b16 %v1692
        %v1787 = vunpack.c.h.b16 %v1692
        %v1788 = vunpack.c.l.b16 %v1693
        %v1789 = vunpack.c.h.b16 %v1693
        %v1790 = vpack.c.b16 %v1728, %v1726
        %v1791 = vpack.c.b16 %v1729, %v1727
        %v1792 = vpack.c.b16 %v1732, %v1730
        %v1793 = vpack.c.b16 %v1733, %v1731
        %v1794 = vpack.c.b16 %v1736, %v1734
        %v1795 = vpack.c.b16 %v1737, %v1735
        %v1796 = vpack.c.b16 %v1740, %v1738
        %v1797 = vpack.c.b16 %v1741, %v1739
        %v1798 = vpack.c.b16 %v1744, %v1742
        %v1799 = vpack.c.b16 %v1745, %v1743
        %v1800 = vpack.c.b16 %v1748, %v1746
        %v1801 = vpack.c.b16 %v1749, %v1747
        %v1802 = vpack.c.b16 %v1752, %v1750
        %v1803 = vpack.c.b16 %v1753, %v1751
        %v1804 = vpack.c.b16 %v1756, %v1754
        %v1805 = vpack.c.b16 %v1757, %v1755
        %v1806 = vpack.c.b16 %v1760, %v1758
        %v1807 = vpack.c.b16 %v1761, %v1759
        %v1808 = vpack.c.b16 %v1764, %v1762
        %v1809 = vpack.c.b16 %v1765, %v1763
        %v1810 = vpack.c.b16 %v1768, %v1766
        %v1811 = vpack.c.b16 %v1769, %v1767
        %v1812 = vpack.c.b16 %v1772, %v1770
        %v1813 = vpack.c.b16 %v1773, %v1771
        %v1814 = vpack.c.b16 %v1776, %v1774
        %v1815 = vpack.c.b16 %v1777, %v1775
        %v1816 = vpack.c.b16 %v1780, %v1778
        %v1817 = vpack.c.b16 %v1781, %v1779
        %v1818 = vpack.c.b16 %v1784, %v1782
        %v1819 = vpack.c.b16 %v1785, %v1783
        %v1820 = vpack.c.b16 %v1788, %v1786
        %v1821 = vpack.c.b16 %v1789, %v1787
        %1854 = vmatpush.bf16.msra.mxu0 %v1804
        %1855 = vmatpush.bf16.msra.mxu0 %v1802
        %1856 = vmatpush.bf16.msra.mxu0 %v1800
        %1857 = vmatpush.bf16.msra.mxu0 %v1798
        %1858 = vmatpush.bf16.msra.mxu0 %v1796
        %1859 = vmatpush.bf16.msra.mxu0 %v1794
        %1860 = vmatpush.bf16.msra.mxu0 %v1792
        %1861 = vmatpush.bf16.msra.mxu0 %v1790
        %1862 = vmatmul.bf16.gmra.mxu0 %v1414
        %v1863 = vpop.f32.mrf.mxu0
        %v1864 = vadd.f32 0.0, %v1863
        %v1865 = vpop.f32.mrf.mxu0
        %1866 = vdwg.mxu0
        %1867 = vmatpush.bf16.msra.mxu0 %v1820
        %1868 = vmatpush.bf16.msra.mxu0 %v1818
        %1869 = vmatpush.bf16.msra.mxu0 %v1816
        %1870 = vmatpush.bf16.msra.mxu0 %v1814
        %1871 = vmatpush.bf16.msra.mxu0 %v1812
        %1872 = vmatpush.bf16.msra.mxu0 %v1810
        %1873 = vmatpush.bf16.msra.mxu0 %v1808
        %1874 = vmatpush.bf16.msra.mxu0 %v1806
        %1875 = vmatmul.bf16.gmra.mxu0 %v1415
        %v1876 = vpop.f32.mrf.mxu0
        %v1877 = vadd.f32 %v1864, %v1876
        %v1878 = vpop.f32.mrf.mxu0
        %1879 = vdwg.mxu0
        %1880 = vmatpush.bf16.msra.mxu0 %v1805
        %1881 = vmatpush.bf16.msra.mxu0 %v1803
        %1882 = vmatpush.bf16.msra.mxu0 %v1801
        %1883 = vmatpush.bf16.msra.mxu0 %v1799
        %1884 = vmatpush.bf16.msra.mxu0 %v1797
        %1885 = vmatpush.bf16.msra.mxu0 %v1795
        %1886 = vmatpush.bf16.msra.mxu0 %v1793
        %1887 = vmatpush.bf16.msra.mxu0 %v1791
        %1888 = vmatmul.bf16.gmra.mxu0 %v1414
        %v1889 = vpop.f32.mrf.mxu0
        %v1890 = vadd.f32 0.0, %v1889
        %v1891 = vpop.f32.mrf.mxu0
        %1892 = vdwg.mxu0
        %1893 = vmatpush.bf16.msra.mxu0 %v1821
        %1894 = vmatpush.bf16.msra.mxu0 %v1819
        %1895 = vmatpush.bf16.msra.mxu0 %v1817
        %1896 = vmatpush.bf16.msra.mxu0 %v1815
        %1897 = vmatpush.bf16.msra.mxu0 %v1813
        %1898 = vmatpush.bf16.msra.mxu0 %v1811
        %1899 = vmatpush.bf16.msra.mxu0 %v1809
        %1900 = vmatpush.bf16.msra.mxu0 %v1807
        %1901 = vmatmul.bf16.gmra.mxu0 %v1415
        %v1902 = vpop.f32.mrf.mxu0
        %v1903 = vadd.f32 %v1890, %v1902
        %v1904 = vpop.f32.mrf.mxu0
        %1905 = vdwg.mxu0
        %v1906 = vpack.c.bf16 %v1903, %v1877
        %1907 = vst [vmem:[%s859] sm:$0xff] %v1906
        %v1908 = vld [vmem:[#allocation14] sm:$0xff]
        %v1909 = vld [vmem:[#allocation14 + $0x8] sm:$0xff]
        %v1910 = vld [vmem:[#allocation14 + $0x10] sm:$0xff]
        %v1911 = vld [vmem:[#allocation14 + $0x18] sm:$0xff]
        %v1912 = vld [vmem:[#allocation14 + $0x20] sm:$0xff]
        %v1913 = vld [vmem:[#allocation14 + $0x28] sm:$0xff]
        %v1914 = vld [vmem:[#allocation14 + $0x30] sm:$0xff]
        %v1915 = vld [vmem:[#allocation14 + $0x38] sm:$0xff]
        %v1916 = vld [vmem:[#allocation14 + $0x40] sm:$0xff]
        %v1917 = vld [vmem:[#allocation14 + $0x48] sm:$0xff]
        %v1918 = vld [vmem:[#allocation14 + $0x50] sm:$0xff]
        %v1919 = vld [vmem:[#allocation14 + $0x58] sm:$0xff]
        %v1920 = vld [vmem:[#allocation14 + $0x60] sm:$0xff]
        %v1921 = vld [vmem:[#allocation14 + $0x68] sm:$0xff]
        %v1922 = vld [vmem:[#allocation14 + $0x70] sm:$0xff]
        %v1923 = vld [vmem:[#allocation14 + $0x78] sm:$0xff]
        %v1924 = vld [vmem:[#allocation14 + $0x80] sm:$0xff]
        %v1925 = vld [vmem:[#allocation14 + $0x88] sm:$0xff]
        %v1926 = vld [vmem:[#allocation14 + $0x90] sm:$0xff]
        %v1927 = vld [vmem:[#allocation14 + $0x98] sm:$0xff]
        %v1928 = vld [vmem:[#allocation14 + $0xa0] sm:$0xff]
        %v1929 = vld [vmem:[#allocation14 + $0xa8] sm:$0xff]
        %v1930 = vld [vmem:[#allocation14 + $0xb0] sm:$0xff]
        %v1931 = vld [vmem:[#allocation14 + $0xb8] sm:$0xff]
        %v1932 = vld [vmem:[#allocation14 + $0xc0] sm:$0xff]
        %v1933 = vld [vmem:[#allocation14 + $0xc8] sm:$0xff]
        %v1934 = vld [vmem:[#allocation14 + $0xd0] sm:$0xff]
        %v1935 = vld [vmem:[#allocation14 + $0xd8] sm:$0xff]
        %v1936 = vld [vmem:[#allocation14 + $0xe0] sm:$0xff]
        %v1937 = vld [vmem:[#allocation14 + $0xe8] sm:$0xff]
        %v1938 = vld [vmem:[#allocation14 + $0xf0] sm:$0xff]
        %v1939 = vld [vmem:[#allocation14 + $0xf8] sm:$0xff]
        %v1972 = vunpack.c.l.b16 %v1908
        %v1973 = vunpack.c.h.b16 %v1908
        %v1974 = vunpack.c.l.b16 %v1909
        %v1975 = vunpack.c.h.b16 %v1909
        %v1976 = vunpack.c.l.b16 %v1910
        %v1977 = vunpack.c.h.b16 %v1910
        %v1978 = vunpack.c.l.b16 %v1911
        %v1979 = vunpack.c.h.b16 %v1911
        %v1980 = vunpack.c.l.b16 %v1912
        %v1981 = vunpack.c.h.b16 %v1912
        %v1982 = vunpack.c.l.b16 %v1913
        %v1983 = vunpack.c.h.b16 %v1913
        %v1984 = vunpack.c.l.b16 %v1914
        %v1985 = vunpack.c.h.b16 %v1914
        %v1986 = vunpack.c.l.b16 %v1915
        %v1987 = vunpack.c.h.b16 %v1915
        %v1988 = vunpack.c.l.b16 %v1916
        %v1989 = vunpack.c.h.b16 %v1916
        %v1990 = vunpack.c.l.b16 %v1917
        %v1991 = vunpack.c.h.b16 %v1917
        %v1992 = vunpack.c.l.b16 %v1918
        %v1993 = vunpack.c.h.b16 %v1918
        %v1994 = vunpack.c.l.b16 %v1919
        %v1995 = vunpack.c.h.b16 %v1919
        %v1996 = vunpack.c.l.b16 %v1920
        %v1997 = vunpack.c.h.b16 %v1920
        %v1998 = vunpack.c.l.b16 %v1921
        %v1999 = vunpack.c.h.b16 %v1921
        %v2000 = vunpack.c.l.b16 %v1922
        %v2001 = vunpack.c.h.b16 %v1922
        %v2002 = vunpack.c.l.b16 %v1923
        %v2003 = vunpack.c.h.b16 %v1923
        %v2004 = vunpack.c.l.b16 %v1924
        %v2005 = vunpack.c.h.b16 %v1924
        %v2006 = vunpack.c.l.b16 %v1925
        %v2007 = vunpack.c.h.b16 %v1925
        %v2008 = vunpack.c.l.b16 %v1926
        %v2009 = vunpack.c.h.b16 %v1926
        %v2010 = vunpack.c.l.b16 %v1927
        %v2011 = vunpack.c.h.b16 %v1927
        %v2012 = vunpack.c.l.b16 %v1928
        %v2013 = vunpack.c.h.b16 %v1928
        %v2014 = vunpack.c.l.b16 %v1929
        %v2015 = vunpack.c.h.b16 %v1929
        %v2016 = vunpack.c.l.b16 %v1930
        %v2017 = vunpack.c.h.b16 %v1930
        %v2018 = vunpack.c.l.b16 %v1931
        %v2019 = vunpack.c.h.b16 %v1931
        %v2020 = vunpack.c.l.b16 %v1932
        %v2021 = vunpack.c.h.b16 %v1932
        %v2022 = vunpack.c.l.b16 %v1933
        %v2023 = vunpack.c.h.b16 %v1933
        %v2024 = vunpack.c.l.b16 %v1934
        %v2025 = vunpack.c.h.b16 %v1934
        %v2026 = vunpack.c.l.b16 %v1935
        %v2027 = vunpack.c.h.b16 %v1935
        %v2028 = vunpack.c.l.b16 %v1936
        %v2029 = vunpack.c.h.b16 %v1936
        %v2030 = vunpack.c.l.b16 %v1937
        %v2031 = vunpack.c.h.b16 %v1937
        %v2032 = vunpack.c.l.b16 %v1938
        %v2033 = vunpack.c.h.b16 %v1938
        %v2034 = vunpack.c.l.b16 %v1939
        %v2035 = vunpack.c.h.b16 %v1939
        %v2036 = vpack.c.b16 %v1974, %v1972
        %v2037 = vpack.c.b16 %v1975, %v1973
        %v2038 = vpack.c.b16 %v1978, %v1976
        %v2039 = vpack.c.b16 %v1979, %v1977
        %v2040 = vpack.c.b16 %v1982, %v1980
        %v2041 = vpack.c.b16 %v1983, %v1981
        %v2042 = vpack.c.b16 %v1986, %v1984
        %v2043 = vpack.c.b16 %v1987, %v1985
        %v2044 = vpack.c.b16 %v1990, %v1988
        %v2045 = vpack.c.b16 %v1991, %v1989
        %v2046 = vpack.c.b16 %v1994, %v1992
        %v2047 = vpack.c.b16 %v1995, %v1993
        %v2048 = vpack.c.b16 %v1998, %v1996
        %v2049 = vpack.c.b16 %v1999, %v1997
        %v2050 = vpack.c.b16 %v2002, %v2000
        %v2051 = vpack.c.b16 %v2003, %v2001
        %v2052 = vpack.c.b16 %v2006, %v2004
        %v2053 = vpack.c.b16 %v2007, %v2005
        %v2054 = vpack.c.b16 %v2010, %v2008
        %v2055 = vpack.c.b16 %v2011, %v2009
        %v2056 = vpack.c.b16 %v2014, %v2012
        %v2057 = vpack.c.b16 %v2015, %v2013
        %v2058 = vpack.c.b16 %v2018, %v2016
        %v2059 = vpack.c.b16 %v2019, %v2017
        %v2060 = vpack.c.b16 %v2022, %v2020
        %v2061 = vpack.c.b16 %v2023, %v2021
        %v2062 = vpack.c.b16 %v2026, %v2024
        %v2063 = vpack.c.b16 %v2027, %v2025
        %v2064 = vpack.c.b16 %v2030, %v2028
        %v2065 = vpack.c.b16 %v2031, %v2029
        %v2066 = vpack.c.b16 %v2034, %v2032
        %v2067 = vpack.c.b16 %v2035, %v2033
        %2100 = vmatpush.bf16.msra.mxu0 %v2050
        %2101 = vmatpush.bf16.msra.mxu0 %v2048
        %2102 = vmatpush.bf16.msra.mxu0 %v2046
        %2103 = vmatpush.bf16.msra.mxu0 %v2044
        %2104 = vmatpush.bf16.msra.mxu0 %v2042
        %2105 = vmatpush.bf16.msra.mxu0 %v2040
        %2106 = vmatpush.bf16.msra.mxu0 %v2038
        %2107 = vmatpush.bf16.msra.mxu0 %v2036
        %2108 = vmatmul.bf16.gmra.mxu0 %v1414
        %v2109 = vpop.f32.mrf.mxu0
        %v2110 = vadd.f32 0.0, %v2109
        %v2111 = vpop.f32.mrf.mxu0
        %2112 = vdwg.mxu0
        %2113 = vmatpush.bf16.msra.mxu0 %v2066
        %2114 = vmatpush.bf16.msra.mxu0 %v2064
        %2115 = vmatpush.bf16.msra.mxu0 %v2062
        %2116 = vmatpush.bf16.msra.mxu0 %v2060
        %2117 = vmatpush.bf16.msra.mxu0 %v2058
        %2118 = vmatpush.bf16.msra.mxu0 %v2056
        %2119 = vmatpush.bf16.msra.mxu0 %v2054
        %2120 = vmatpush.bf16.msra.mxu0 %v2052
        %2121 = vmatmul.bf16.gmra.mxu0 %v1415
        %v2122 = vpop.f32.mrf.mxu0
        %v2123 = vadd.f32 %v2110, %v2122
        %v2124 = vpop.f32.mrf.mxu0
        %2125 = vdwg.mxu0
        %2126 = vmatpush.bf16.msra.mxu0 %v2051
        %2127 = vmatpush.bf16.msra.mxu0 %v2049
        %2128 = vmatpush.bf16.msra.mxu0 %v2047
        %2129 = vmatpush.bf16.msra.mxu0 %v2045
        %2130 = vmatpush.bf16.msra.mxu0 %v2043
        %2131 = vmatpush.bf16.msra.mxu0 %v2041
        %2132 = vmatpush.bf16.msra.mxu0 %v2039
        %2133 = vmatpush.bf16.msra.mxu0 %v2037
        %2134 = vmatmul.bf16.gmra.mxu0 %v1414
        %v2135 = vpop.f32.mrf.mxu0
        %v2136 = vadd.f32 0.0, %v2135
        %v2137 = vpop.f32.mrf.mxu0
        %2138 = vdwg.mxu0
        %2139 = vmatpush.bf16.msra.mxu0 %v2067
        %2140 = vmatpush.bf16.msra.mxu0 %v2065
        %2141 = vmatpush.bf16.msra.mxu0 %v2063
        %2142 = vmatpush.bf16.msra.mxu0 %v2061
        %2143 = vmatpush.bf16.msra.mxu0 %v2059
        %2144 = vmatpush.bf16.msra.mxu0 %v2057
        %2145 = vmatpush.bf16.msra.mxu0 %v2055
        %2146 = vmatpush.bf16.msra.mxu0 %v2053
        %2147 = vmatmul.bf16.gmra.mxu0 %v1415
        %v2148 = vpop.f32.mrf.mxu0
        %v2149 = vadd.f32 %v2136, %v2148
        %v2150 = vpop.f32.mrf.mxu0
        %2151 = vdwg.mxu0
        %v2152 = vpack.c.bf16 %v2149, %v2123
        %2153 = vst [vmem:[%s866] sm:$0xff] %v2152
        %s2154 = sand.u32 %s472, 1
        %s2155 = scalar_lea.sflag [#allocation4], %s2154
        %s2156 = sand.u32 %s472, 1
        %s2157 = smul.addr %s2156, 8
        %s2158 = scalar_lea.vmem [#allocation16], %s2157
        %s2159 = sand.u32 %s50, 1
        %s2160 = scalar_lea.sflag [#allocation18], %s2159
        %s2161 = sand.u32 %s498, 1
        %s2162 = smul.addr %s2161, 8
        %s2163 = scalar_lea.vmem [#allocation17], %s2162
        %s2164 = sand.u32 %s50, 1
        %s2165 = scalar_lea.sflag [#allocation18], %s2164
        %s2166 = sand.u32 %s524, 1
        %s2167 = smul.addr %s2166, 8
        %s2168 = scalar_lea.vmem [#allocation19], %s2167
        %s2169 = sand.u32 %s550, 1
        %s2170 = scalar_lea.sflag [#allocation21], %s2169
        %s2171 = sand.u32 %s550, 1
        %s2172 = smul.addr %s2171, 8
        %s2173 = scalar_lea.vmem [#allocation20], %s2172
        // Predicated region
        $region129: #{tpu_custom_call.1} parent=95 // pred_check
          %p2174 = pneg %p482
        $region130: #{tpu_custom_call.1} parent=95 // pred_check_branch
          %2176 = sbr.rel (%p2174) target = $region132
        $region131: #{tpu_custom_call.1} parent=95 // pred_region
          %2178 = vsyncadd %s2155, 0
          %s2179 = smul.addr %s50, 2
          %s2180 = smul.addr %s2179, 4
          %s2181 = scalar_lea.hbm %s19, %s2180
          %s2183 = sshll.u32 %s2158, 4
          %s2184 = int_to_ptr.vmem [resolvable:$true] %s2183
          %s2185 = sshll.u32 %s2181, 4
          %s2186 = int_to_ptr.hbm [resolvable:$true] %s2185
          %2188 = dma.vmem_to_hbm [thread:$0]  %s2184, 128, %s2186, %s2155
        $region132: #{tpu_custom_call.1} parent=95 // pred_fallthru
          _
        // Predicated region
        $region133: #{tpu_custom_call.1} parent=95 // pred_check
          %p2189 = pneg %p508
        $region134: #{tpu_custom_call.1} parent=95 // pred_check_branch
          %2191 = sbr.rel (%p2189) target = $region136
        $region135: #{tpu_custom_call.1} parent=95 // pred_region
          %2193 = vsyncadd %s2160, 0
          %s2194 = smul.addr %s50, 2
          %s2195 = smul.addr %s2194, 4
          %s2196 = scalar_lea.hbm %s20, %s2195
          %s2198 = sshll.u32 %s2163, 4
          %s2199 = int_to_ptr.vmem [resolvable:$true] %s2198
          %s2200 = sshll.u32 %s2196, 4
          %s2201 = int_to_ptr.hbm [resolvable:$true] %s2200
          %2203 = dma.vmem_to_hbm [thread:$0]  %s2199, 128, %s2201, %s2160
        $region136: #{tpu_custom_call.1} parent=95 // pred_fallthru
          _
        // Predicated region
        $region137: #{tpu_custom_call.1} parent=95 // pred_check
          %p2204 = pneg %p534
        $region138: #{tpu_custom_call.1} parent=95 // pred_check_branch
          %2206 = sbr.rel (%p2204) target = $region140
        $region139: #{tpu_custom_call.1} parent=95 // pred_region
          %2208 = vsyncadd %s2165, 0
          %s2209 = smul.addr %s50, 2
          %s2210 = smul.addr %s2209, 4
          %s2211 = scalar_lea.hbm %s21, %s2210
          %s2213 = sshll.u32 %s2168, 4
          %s2214 = int_to_ptr.vmem [resolvable:$true] %s2213
          %s2215 = sshll.u32 %s2211, 4
          %s2216 = int_to_ptr.hbm [resolvable:$true] %s2215
          %2218 = dma.vmem_to_hbm [thread:$0]  %s2214, 128, %s2216, %s2165
        $region140: #{tpu_custom_call.1} parent=95 // pred_fallthru
          _
        // Predicated region
        $region141: #{tpu_custom_call.1} parent=95 // pred_check
          %p2219 = pneg %p560
        $region142: #{tpu_custom_call.1} parent=95 // pred_check_branch
          %2221 = sbr.rel (%p2219) target = $region144
        $region143: #{tpu_custom_call.1} parent=95 // pred_region
          %2223 = vsyncadd %s2170, 0
          %s2224 = smul.addr %s50, 2
          %s2225 = smul.addr %s2224, 4
          %s2226 = scalar_lea.hbm %s22, %s2225
          %s2228 = sshll.u32 %s2173, 4
          %s2229 = int_to_ptr.vmem [resolvable:$true] %s2228
          %s2230 = sshll.u32 %s2226, 4
          %s2231 = int_to_ptr.hbm [resolvable:$true] %s2230
          %2233 = dma.vmem_to_hbm [thread:$0]  %s2229, 128, %s2231, %s2170
        $region144: #{tpu_custom_call.1} parent=95 // pred_fallthru
          _
      $region96: #{tpu_custom_call.1} parent=5 // pred_fallthru
        _
      %p2234 = scmp.le.s32.totalorder 2, %s45
      // Predicated region
      $region145: #{tpu_custom_call.1} parent=5 // pred_check
        %p2235 = pneg %p2234
      $region146: #{tpu_custom_call.1} parent=5 // pred_check_branch
        %2237 = sbr.rel (%p2235) target = $region148
      $region147: #{tpu_custom_call.1} parent=5 // pred_region
        %s2238 = ssub.s32 %s45, 2
        // Predicated region
        $region149: #{tpu_custom_call.1} parent=147 // pred_check
          %p2239 = pneg %p488
        $region150: #{tpu_custom_call.1} parent=147 // pred_check_branch
          %2241 = sbr.rel (%p2239) target = $region152
        $region151: #{tpu_custom_call.1} parent=147 // pred_region
          %s2242 = sand.u32 %s473, 1
          %s2243 = scalar_lea.sflag [#allocation4], %s2242
          %s2244 = sand.u32 %s473, 1
          %s2245 = smul.addr %s2244, 8
          %s2246 = scalar_lea.vmem [#allocation16], %s2245
          %2248 = dma.done %s2243, 128
        $region152: #{tpu_custom_call.1} parent=147 // pred_fallthru
          _
        // Predicated region
        $region153: #{tpu_custom_call.1} parent=147 // pred_check
          %p2249 = pneg %p514
        $region154: #{tpu_custom_call.1} parent=147 // pred_check_branch
          %2251 = sbr.rel (%p2249) target = $region156
        $region155: #{tpu_custom_call.1} parent=147 // pred_region
          %s2252 = sand.u32 %s51, 1
          %s2253 = scalar_lea.sflag [#allocation18], %s2252
          %s2254 = sand.u32 %s499, 1
          %s2255 = smul.addr %s2254, 8
          %s2256 = scalar_lea.vmem [#allocation17], %s2255
          %2258 = dma.done %s2253, 128
        $region156: #{tpu_custom_call.1} parent=147 // pred_fallthru
          _
        // Predicated region
        $region157: #{tpu_custom_call.1} parent=147 // pred_check
          %p2259 = pneg %p540
        $region158: #{tpu_custom_call.1} parent=147 // pred_check_branch
          %2261 = sbr.rel (%p2259) target = $region160
        $region159: #{tpu_custom_call.1} parent=147 // pred_region
          %s2262 = sand.u32 %s51, 1
          %s2263 = scalar_lea.sflag [#allocation18], %s2262
          %s2264 = sand.u32 %s525, 1
          %s2265 = smul.addr %s2264, 8
          %s2266 = scalar_lea.vmem [#allocation19], %s2265
          %2268 = dma.done %s2263, 128
        $region160: #{tpu_custom_call.1} parent=147 // pred_fallthru
          _
        // Predicated region
        $region161: #{tpu_custom_call.1} parent=147 // pred_check
          %p2269 = pneg %p566
        $region162: #{tpu_custom_call.1} parent=147 // pred_check_branch
          %2271 = sbr.rel (%p2269) target = $region164
        $region163: #{tpu_custom_call.1} parent=147 // pred_region
          %s2272 = sand.u32 %s551, 1
          %s2273 = scalar_lea.sflag [#allocation21], %s2272
          %s2274 = sand.u32 %s551, 1
          %s2275 = smul.addr %s2274, 8
          %s2276 = scalar_lea.vmem [#allocation20], %s2275
          %2278 = dma.done %s2273, 128
        $region164: #{tpu_custom_call.1} parent=147 // pred_fallthru
          _
      $region148: #{tpu_custom_call.1} parent=5 // pred_fallthru
        _
    $region6: #{tpu_custom_call.1} parent=1 // loop_footer
      %s49 = sadd.s32 1, %s45
    $region7: #{tpu_custom_call.1} parent=1 // loop_footer_branch
      %44 = sbr.rel target = $region3
    $region8: #{tpu_custom_call.1} parent=1 // loop_exit
      _
    %2279 = vsyncpa [#allocation3], 1
    %s2280 = scalar_lea.sflag [#allocation3], 1
    %2281 = vsyncpa %s2280, 1
    %2282 = vsyncpa [#allocation6], 1
    %2283 = vsyncpa [#allocation9], 1
    %2284 = vsyncpa [#allocation12], 1
    %2285 = vsyncpa [#allocation15], 1
    %2286 = vsyncpa [#allocation4], 1
    %s2287 = scalar_lea.sflag [#allocation4], 1
    %2288 = vsyncpa %s2287, 1
    %2289 = vsyncpa [#allocation18], 1
    %s2290 = scalar_lea.sflag [#allocation18], 1
    %2291 = vsyncpa %s2290, 1
    %2292 = vsyncpa [#allocation21], 1
    %s2293 = scalar_lea.sflag [#allocation21], 1
    %2294 = vsyncpa %s2293, 1

</llo_original>
